<compile_context>
chip_gen: v7x
topology: tpu7x:2x2x1
jax: 0.10.0
libtpu: 0.0.40
codegen_flags: <defaults>
</compile_context>

<pallas_src>
import functools
import math

import jax
import jax.numpy as jnp
from jax.experimental import pallas as pl
from jax.experimental.pallas import tpu as pltpu

# Small, module-consistent shapes.
B, T, C, H = 2, 8, 32, 4          # batch, seq, n_embeddings, n_heads
HD = C // H                       # head dim


def mha_kernel(xq_ref, xkv_ref, wq_ref, bq_ref, wkv_ref, bkv_ref,
               wp_ref, bp_ref, o_ref, *, batch, seq, heads, causal):
    """Single invocation: all batch elements as one (batch*seq, C) slab."""
    c = wq_ref.shape[0]
    hd = c // heads

    # Fused projections (1/sqrt(C) already folded into wq/bq on the host).
    q = jnp.dot(xq_ref[...], wq_ref[...],
                preferred_element_type=jnp.float32) + bq_ref[...]
    kv = jnp.dot(xkv_ref[...], wkv_ref[...],
                 preferred_element_type=jnp.float32) + bkv_ref[...]

    wp = wp_ref[...]
    bp = bp_ref[...]

    if causal:
        row = jax.lax.broadcasted_iota(jnp.int32, (seq, seq), 0)
        col = jax.lax.broadcasted_iota(jnp.int32, (seq, seq), 1)
        addmask = jnp.where(col <= row, jnp.float32(0.0), jnp.float32(-1e30))

    # Unrolled batch x head loops (batches must not mix inside q k^T).  Batch
    # row windows are sublane-aligned (seq == 8); head windows are static
    # 8-lane / 8-sublane slices.  8 tiny iterations -> well under 64 vregs.
    for b in range(batch):
        r0 = b * seq
        q_b = q[r0:r0 + seq, :]
        # One K-slab transpose per batch; lane slice at offset 0 (no rotate).
        kT_b = kv[r0:r0 + seq, :c].T                      # (C, seq)
        acc_b = jnp.zeros((seq, c), jnp.float32)
        for h in range(heads):
            c0 = h * hd
            q_bh = q_b[:, c0:c0 + hd]                     # (seq, hd)
            kT_bh = kT_b[c0:c0 + hd, :]                   # (hd, seq) sublane slice
            v_bh = kv[r0:r0 + seq, c + c0:c + c0 + hd]    # (seq, hd)
            # s[i, j] = <q_i, k_j>  (scale pre-folded into the Q projection)
            s = jnp.dot(q_bh, kT_bh, preferred_element_type=jnp.float32)
            if causal:
                s = s + addmask
            s = s - jnp.max(s, axis=-1, keepdims=True)
            p = jnp.exp(s)
            p = p / jnp.sum(p, axis=-1, keepdims=True)
            pv = jnp.dot(p, v_bh, preferred_element_type=jnp.float32)
            # Fused output projection: fold this head straight through its
            # wp row block and accumulate -- no merged-z scratch needed.
            acc_b = acc_b + jnp.dot(pv, wp[c0:c0 + hd, :],
                                    preferred_element_type=jnp.float32)
        # nn.Dropout -> identity in eval mode.
        o_ref[r0:r0 + seq, :] = (acc_b + bp).astype(o_ref.dtype)


def multi_headed_attention(x, params, encoder_out=None, mask=False):
    """Wrapper: one pallas_call, no grid — everything resident in VMEM."""
    b, t, c = x.shape
    xq = x.reshape(b * t, c)
    xkv = (x if encoder_out is None else encoder_out).reshape(b * t, c)
    kernel = functools.partial(mha_kernel, batch=b, seq=t,
                               heads=params["n_heads"], causal=bool(mask))
    out = pl.pallas_call(
        kernel,
        out_shape=jax.ShapeDtypeStruct((b * t, c), x.dtype),
    )(xq, xkv, params["wq_s"], params["bq_s"], params["wkv"], params["bkv"],
      params["wp"], params["bp"])
    return out.reshape(b, t, c)


def reference(x, p, encoder_out=None, mask=False):
    """Pure-JAX mirror of the PyTorch forward (eval mode) for validation."""
    b, t, c = x.shape
    h = p["n_heads"]
    hd = c // h

    def lin(v, w, bias):
        return v @ w + bias

    kv_in = x if encoder_out is None else encoder_out
    q = lin(x, p["wq"], p["bq"]).reshape(b, t, h, hd).transpose(0, 2, 1, 3)
    k = lin(kv_in, p["wk"], p["bk"]).reshape(b, t, h, hd).transpose(0, 2, 1, 3)
    v = lin(kv_in, p["wv"], p["bv"]).reshape(b, t, h, hd).transpose(0, 2, 1, 3)
    s = q @ jnp.swapaxes(k, -1, -2) / math.sqrt(c)
    if mask:
        tri = jnp.tril(jnp.ones((t, t), dtype=bool))
        s = jnp.where(tri, s, -jnp.inf)
    s = jax.nn.softmax(s, axis=-1)
    z = (s @ v).transpose(0, 2, 1, 3).reshape(b, t, c)
    return lin(z, p["wp"], p["bp"])


if __name__ == "__main__":
    key = jax.random.PRNGKey(0)
    ks = jax.random.split(key, 10)

    def w(k_, shape, scale=0.1):
        return scale * jax.random.normal(k_, shape, jnp.float32)

    params = {
        "n_heads": H,
        "wq": w(ks[0], (C, C)), "bq": w(ks[1], (1, C)),
        "wk": w(ks[2], (C, C)), "bk": w(ks[3], (1, C)),
        "wv": w(ks[4], (C, C)), "bv": w(ks[5], (1, C)),
        "wp": w(ks[6], (C, C)), "bp": w(ks[7], (1, C)),
    }
    # Host-side weight fusion: fold 1/sqrt(C) into the Q projection, fuse K|V.
    scale = 1.0 / math.sqrt(C)
    params["wq_s"] = params["wq"] * scale
    params["bq_s"] = params["bq"] * scale
    params["wkv"] = jnp.concatenate([params["wk"], params["wv"]], axis=1)
    params["bkv"] = jnp.concatenate([params["bk"], params["bv"]], axis=1)

    x = jax.random.normal(ks[8], (B, T, C), jnp.float32)
    enc = jax.random.normal(ks[9], (B, T, C), jnp.float32)

    # Case 1: masked self-attention (decoder-style usage).
    out1 = jax.block_until_ready(multi_headed_attention(x, params, mask=True))
    ref1 = reference(x, params, mask=True)
    # Case 2: cross-attention against encoder output, no mask (forward defaults).
    out2 = jax.block_until_ready(
        multi_headed_attention(x, params, encoder_out=enc, mask=False))
    ref2 = reference(x, params, encoder_out=enc, mask=False)

    assert out1.shape == (B, T, C) and out2.shape == (B, T, C)
    err1 = float(jnp.max(jnp.abs(out1 - ref1)))
    err2 = float(jnp.max(jnp.abs(out2 - ref2)))
    if err1 > 1e-4 or err2 > 1e-4:
        raise AssertionError(
            f"kernel/reference mismatch: self={err1:.3e}, cross={err2:.3e}")
    print("KERNEL_OK")
</pallas_src>

<mosaic_0001>
module attributes {stable_mosaic.version = 11 : i64} {
  func.func @mha_kernel(%arg0: memref<16x32xf32, #tpu.memory_space<vmem>>, %arg1: memref<16x32xf32, #tpu.memory_space<vmem>>, %arg2: memref<32x32xf32, #tpu.memory_space<vmem>>, %arg3: memref<1x32xf32, #tpu.memory_space<vmem>>, %arg4: memref<32x64xf32, #tpu.memory_space<vmem>>, %arg5: memref<1x64xf32, #tpu.memory_space<vmem>>, %arg6: memref<32x32xf32, #tpu.memory_space<vmem>>, %arg7: memref<1x32xf32, #tpu.memory_space<vmem>>, %arg8: memref<16x32xf32, #tpu.memory_space<vmem>>) attributes {dimension_semantics = [], scalar_prefetch = 0 : i64, scratch_operands = 0 : i64, tpu.core_type = #tpu.core_type<tc>} {
    %c0 = arith.constant 0 : index
    %c0_0 = arith.constant 0 : index
    %0 = vector.load %arg0[%c0, %c0_0] : memref<16x32xf32, #tpu.memory_space<vmem>>, vector<16x32xf32>
    %c0_1 = arith.constant 0 : index
    %c0_2 = arith.constant 0 : index
    %1 = vector.load %arg2[%c0_1, %c0_2] : memref<32x32xf32, #tpu.memory_space<vmem>>, vector<32x32xf32>
    %cst = arith.constant dense<0.000000e+00> : vector<16x32xf32>
    %2 = tpu.matmul %0, %1, %cst {dimension_numbers = #tpu.dot_dimension_numbers<[1], [0], [0], [1], [0, 0, 1, 1], [], []>} : vector<16x32xf32>, vector<32x32xf32>, vector<16x32xf32> -> vector<16x32xf32>
    %c0_3 = arith.constant 0 : index
    %c0_4 = arith.constant 0 : index
    %3 = vector.load %arg3[%c0_3, %c0_4] : memref<1x32xf32, #tpu.memory_space<vmem>>, vector<1x32xf32>
    %4 = vector.broadcast %3 : vector<1x32xf32> to vector<16x32xf32>
    %5 = arith.addf %2, %4 : vector<16x32xf32>
    %c0_5 = arith.constant 0 : index
    %c0_6 = arith.constant 0 : index
    %6 = vector.load %arg1[%c0_5, %c0_6] : memref<16x32xf32, #tpu.memory_space<vmem>>, vector<16x32xf32>
    %c0_7 = arith.constant 0 : index
    %c0_8 = arith.constant 0 : index
    %7 = vector.load %arg4[%c0_7, %c0_8] : memref<32x64xf32, #tpu.memory_space<vmem>>, vector<32x64xf32>
    %cst_9 = arith.constant dense<0.000000e+00> : vector<16x64xf32>
    %8 = tpu.matmul %6, %7, %cst_9 {dimension_numbers = #tpu.dot_dimension_numbers<[1], [0], [0], [1], [0, 0, 1, 1], [], []>} : vector<16x32xf32>, vector<32x64xf32>, vector<16x64xf32> -> vector<16x64xf32>
    %c0_10 = arith.constant 0 : index
    %c0_11 = arith.constant 0 : index
    %9 = vector.load %arg5[%c0_10, %c0_11] : memref<1x64xf32, #tpu.memory_space<vmem>>, vector<1x64xf32>
    %10 = vector.broadcast %9 : vector<1x64xf32> to vector<16x64xf32>
    %11 = arith.addf %8, %10 : vector<16x64xf32>
    %c0_12 = arith.constant 0 : index
    %c0_13 = arith.constant 0 : index
    %12 = vector.load %arg6[%c0_12, %c0_13] : memref<32x32xf32, #tpu.memory_space<vmem>>, vector<32x32xf32>
    %c0_14 = arith.constant 0 : index
    %c0_15 = arith.constant 0 : index
    %13 = vector.load %arg7[%c0_14, %c0_15] : memref<1x32xf32, #tpu.memory_space<vmem>>, vector<1x32xf32>
    %14 = tpu.iota {dimensions = array<i32: 0>} : vector<8x8xi32>
    %15 = tpu.iota {dimensions = array<i32: 1>} : vector<8x8xi32>
    %16 = arith.cmpi sle, %15, %14 : vector<8x8xi32>
    %cst_16 = arith.constant 0.000000e+00 : f32
    %cst_17 = arith.constant -1.000000e+30 : f32
    %17 = vector.broadcast %cst_16 : f32 to vector<8x8xf32>
    %18 = vector.broadcast %cst_17 : f32 to vector<8x8xf32>
    %19 = arith.select %16, %17, %18 : vector<8x8xi1>, vector<8x8xf32>
    %20 = vector.extract_strided_slice %5 {offsets = [0, 0], sizes = [8, 32], strides = [1, 1]} : vector<16x32xf32> to vector<8x32xf32>
    %21 = vector.extract_strided_slice %11 {offsets = [0, 0], sizes = [8, 32], strides = [1, 1]} : vector<16x64xf32> to vector<8x32xf32>
    %22 = tpu.transpose %21, [1, 0] : vector<8x32xf32> -> vector<32x8xf32>
    %cst_18 = arith.constant 0.000000e+00 : f32
    %23 = vector.broadcast %cst_18 : f32 to vector<8x32xf32>
    %24 = vector.extract_strided_slice %20 {offsets = [0, 0], sizes = [8, 8], strides = [1, 1]} : vector<8x32xf32> to vector<8x8xf32>
    %25 = vector.extract_strided_slice %22 {offsets = [0, 0], sizes = [8, 8], strides = [1, 1]} : vector<32x8xf32> to vector<8x8xf32>
    %26 = vector.extract_strided_slice %11 {offsets = [0, 32], sizes = [8, 8], strides = [1, 1]} : vector<16x64xf32> to vector<8x8xf32>
    %cst_19 = arith.constant dense<0.000000e+00> : vector<8x8xf32>
    %27 = tpu.matmul %24, %25, %cst_19 {dimension_numbers = #tpu.dot_dimension_numbers<[1], [0], [0], [1], [0, 0, 1, 1], [], []>} : vector<8x8xf32>, vector<8x8xf32>, vector<8x8xf32> -> vector<8x8xf32>
    %28 = arith.addf %27, %19 : vector<8x8xf32>
    %cst_20 = arith.constant dense<0xFF800000> : vector<8xf32>
    %29 = vector.multi_reduction <maximumf>, %28, %cst_20 [1] : vector<8x8xf32> to vector<8xf32>
    %30 = vector.shape_cast %29 : vector<8xf32> to vector<8x1xf32>
    %31 = vector.broadcast %30 : vector<8x1xf32> to vector<8x8xf32>
    %32 = arith.subf %28, %31 : vector<8x8xf32>
    %33 = math.exp %32 : vector<8x8xf32>
    %cst_21 = arith.constant dense<0.000000e+00> : vector<8xf32>
    %34 = vector.multi_reduction <add>, %33, %cst_21 [1] : vector<8x8xf32> to vector<8xf32>
    %35 = vector.shape_cast %34 : vector<8xf32> to vector<8x1xf32>
    %36 = vector.broadcast %35 : vector<8x1xf32> to vector<8x8xf32>
    %37 = arith.divf %33, %36 : vector<8x8xf32>
    %cst_22 = arith.constant dense<0.000000e+00> : vector<8x8xf32>
    %38 = tpu.matmul %37, %26, %cst_22 {dimension_numbers = #tpu.dot_dimension_numbers<[1], [0], [0], [1], [0, 0, 1, 1], [], []>} : vector<8x8xf32>, vector<8x8xf32>, vector<8x8xf32> -> vector<8x8xf32>
    %39 = vector.extract_strided_slice %12 {offsets = [0, 0], sizes = [8, 32], strides = [1, 1]} : vector<32x32xf32> to vector<8x32xf32>
    %cst_23 = arith.constant dense<0.000000e+00> : vector<8x32xf32>
    %40 = tpu.matmul %38, %39, %cst_23 {dimension_numbers = #tpu.dot_dimension_numbers<[1], [0], [0], [1], [0, 0, 1, 1], [], []>} : vector<8x8xf32>, vector<8x32xf32>, vector<8x32xf32> -> vector<8x32xf32>
    %41 = arith.addf %23, %40 : vector<8x32xf32>
    %42 = vector.extract_strided_slice %20 {offsets = [0, 8], sizes = [8, 8], strides = [1, 1]} : vector<8x32xf32> to vector<8x8xf32>
    %43 = vector.extract_strided_slice %22 {offsets = [8, 0], sizes = [8, 8], strides = [1, 1]} : vector<32x8xf32> to vector<8x8xf32>
    %44 = vector.extract_strided_slice %11 {offsets = [0, 40], sizes = [8, 8], strides = [1, 1]} : vector<16x64xf32> to vector<8x8xf32>
    %cst_24 = arith.constant dense<0.000000e+00> : vector<8x8xf32>
    %45 = tpu.matmul %42, %43, %cst_24 {dimension_numbers = #tpu.dot_dimension_numbers<[1], [0], [0], [1], [0, 0, 1, 1], [], []>} : vector<8x8xf32>, vector<8x8xf32>, vector<8x8xf32> -> vector<8x8xf32>
    %46 = arith.addf %45, %19 : vector<8x8xf32>
    %cst_25 = arith.constant dense<0xFF800000> : vector<8xf32>
    %47 = vector.multi_reduction <maximumf>, %46, %cst_25 [1] : vector<8x8xf32> to vector<8xf32>
    %48 = vector.shape_cast %47 : vector<8xf32> to vector<8x1xf32>
    %49 = vector.broadcast %48 : vector<8x1xf32> to vector<8x8xf32>
    %50 = arith.subf %46, %49 : vector<8x8xf32>
    %51 = math.exp %50 : vector<8x8xf32>
    %cst_26 = arith.constant dense<0.000000e+00> : vector<8xf32>
    %52 = vector.multi_reduction <add>, %51, %cst_26 [1] : vector<8x8xf32> to vector<8xf32>
    %53 = vector.shape_cast %52 : vector<8xf32> to vector<8x1xf32>
    %54 = vector.broadcast %53 : vector<8x1xf32> to vector<8x8xf32>
    %55 = arith.divf %51, %54 : vector<8x8xf32>
    %cst_27 = arith.constant dense<0.000000e+00> : vector<8x8xf32>
    %56 = tpu.matmul %55, %44, %cst_27 {dimension_numbers = #tpu.dot_dimension_numbers<[1], [0], [0], [1], [0, 0, 1, 1], [], []>} : vector<8x8xf32>, vector<8x8xf32>, vector<8x8xf32> -> vector<8x8xf32>
    %57 = vector.extract_strided_slice %12 {offsets = [8, 0], sizes = [8, 32], strides = [1, 1]} : vector<32x32xf32> to vector<8x32xf32>
    %cst_28 = arith.constant dense<0.000000e+00> : vector<8x32xf32>
    %58 = tpu.matmul %56, %57, %cst_28 {dimension_numbers = #tpu.dot_dimension_numbers<[1], [0], [0], [1], [0, 0, 1, 1], [], []>} : vector<8x8xf32>, vector<8x32xf32>, vector<8x32xf32> -> vector<8x32xf32>
    %59 = arith.addf %41, %58 : vector<8x32xf32>
    %60 = vector.extract_strided_slice %20 {offsets = [0, 16], sizes = [8, 8], strides = [1, 1]} : vector<8x32xf32> to vector<8x8xf32>
    %61 = vector.extract_strided_slice %22 {offsets = [16, 0], sizes = [8, 8], strides = [1, 1]} : vector<32x8xf32> to vector<8x8xf32>
    %62 = vector.extract_strided_slice %11 {offsets = [0, 48], sizes = [8, 8], strides = [1, 1]} : vector<16x64xf32> to vector<8x8xf32>
    %cst_29 = arith.constant dense<0.000000e+00> : vector<8x8xf32>
    %63 = tpu.matmul %60, %61, %cst_29 {dimension_numbers = #tpu.dot_dimension_numbers<[1], [0], [0], [1], [0, 0, 1, 1], [], []>} : vector<8x8xf32>, vector<8x8xf32>, vector<8x8xf32> -> vector<8x8xf32>
    %64 = arith.addf %63, %19 : vector<8x8xf32>
    %cst_30 = arith.constant dense<0xFF800000> : vector<8xf32>
    %65 = vector.multi_reduction <maximumf>, %64, %cst_30 [1] : vector<8x8xf32> to vector<8xf32>
    %66 = vector.shape_cast %65 : vector<8xf32> to vector<8x1xf32>
    %67 = vector.broadcast %66 : vector<8x1xf32> to vector<8x8xf32>
    %68 = arith.subf %64, %67 : vector<8x8xf32>
    %69 = math.exp %68 : vector<8x8xf32>
    %cst_31 = arith.constant dense<0.000000e+00> : vector<8xf32>
    %70 = vector.multi_reduction <add>, %69, %cst_31 [1] : vector<8x8xf32> to vector<8xf32>
    %71 = vector.shape_cast %70 : vector<8xf32> to vector<8x1xf32>
    %72 = vector.broadcast %71 : vector<8x1xf32> to vector<8x8xf32>
    %73 = arith.divf %69, %72 : vector<8x8xf32>
    %cst_32 = arith.constant dense<0.000000e+00> : vector<8x8xf32>
    %74 = tpu.matmul %73, %62, %cst_32 {dimension_numbers = #tpu.dot_dimension_numbers<[1], [0], [0], [1], [0, 0, 1, 1], [], []>} : vector<8x8xf32>, vector<8x8xf32>, vector<8x8xf32> -> vector<8x8xf32>
    %75 = vector.extract_strided_slice %12 {offsets = [16, 0], sizes = [8, 32], strides = [1, 1]} : vector<32x32xf32> to vector<8x32xf32>
    %cst_33 = arith.constant dense<0.000000e+00> : vector<8x32xf32>
    %76 = tpu.matmul %74, %75, %cst_33 {dimension_numbers = #tpu.dot_dimension_numbers<[1], [0], [0], [1], [0, 0, 1, 1], [], []>} : vector<8x8xf32>, vector<8x32xf32>, vector<8x32xf32> -> vector<8x32xf32>
    %77 = arith.addf %59, %76 : vector<8x32xf32>
    %78 = vector.extract_strided_slice %20 {offsets = [0, 24], sizes = [8, 8], strides = [1, 1]} : vector<8x32xf32> to vector<8x8xf32>
    %79 = vector.extract_strided_slice %22 {offsets = [24, 0], sizes = [8, 8], strides = [1, 1]} : vector<32x8xf32> to vector<8x8xf32>
    %80 = vector.extract_strided_slice %11 {offsets = [0, 56], sizes = [8, 8], strides = [1, 1]} : vector<16x64xf32> to vector<8x8xf32>
    %cst_34 = arith.constant dense<0.000000e+00> : vector<8x8xf32>
    %81 = tpu.matmul %78, %79, %cst_34 {dimension_numbers = #tpu.dot_dimension_numbers<[1], [0], [0], [1], [0, 0, 1, 1], [], []>} : vector<8x8xf32>, vector<8x8xf32>, vector<8x8xf32> -> vector<8x8xf32>
    %82 = arith.addf %81, %19 : vector<8x8xf32>
    %cst_35 = arith.constant dense<0xFF800000> : vector<8xf32>
    %83 = vector.multi_reduction <maximumf>, %82, %cst_35 [1] : vector<8x8xf32> to vector<8xf32>
    %84 = vector.shape_cast %83 : vector<8xf32> to vector<8x1xf32>
    %85 = vector.broadcast %84 : vector<8x1xf32> to vector<8x8xf32>
    %86 = arith.subf %82, %85 : vector<8x8xf32>
    %87 = math.exp %86 : vector<8x8xf32>
    %cst_36 = arith.constant dense<0.000000e+00> : vector<8xf32>
    %88 = vector.multi_reduction <add>, %87, %cst_36 [1] : vector<8x8xf32> to vector<8xf32>
    %89 = vector.shape_cast %88 : vector<8xf32> to vector<8x1xf32>
    %90 = vector.broadcast %89 : vector<8x1xf32> to vector<8x8xf32>
    %91 = arith.divf %87, %90 : vector<8x8xf32>
    %cst_37 = arith.constant dense<0.000000e+00> : vector<8x8xf32>
    %92 = tpu.matmul %91, %80, %cst_37 {dimension_numbers = #tpu.dot_dimension_numbers<[1], [0], [0], [1], [0, 0, 1, 1], [], []>} : vector<8x8xf32>, vector<8x8xf32>, vector<8x8xf32> -> vector<8x8xf32>
    %93 = vector.extract_strided_slice %12 {offsets = [24, 0], sizes = [8, 32], strides = [1, 1]} : vector<32x32xf32> to vector<8x32xf32>
    %cst_38 = arith.constant dense<0.000000e+00> : vector<8x32xf32>
    %94 = tpu.matmul %92, %93, %cst_38 {dimension_numbers = #tpu.dot_dimension_numbers<[1], [0], [0], [1], [0, 0, 1, 1], [], []>} : vector<8x8xf32>, vector<8x32xf32>, vector<8x32xf32> -> vector<8x32xf32>
    %95 = arith.addf %77, %94 : vector<8x32xf32>
    %96 = vector.broadcast %13 : vector<1x32xf32> to vector<8x32xf32>
    %97 = arith.addf %95, %96 : vector<8x32xf32>
    %c0_39 = arith.constant 0 : index
    %c0_40 = arith.constant 0 : index
    %98 = vector.load %arg8[%c0_39, %c0_40] : memref<16x32xf32, #tpu.memory_space<vmem>>, vector<8x32xf32>
    tpu.vector_store %arg8[%c0_39, %c0_40], %97 {strides = array<i32>} : memref<16x32xf32, #tpu.memory_space<vmem>>, vector<8x32xf32>,
    %99 = vector.extract_strided_slice %5 {offsets = [8, 0], sizes = [8, 32], strides = [1, 1]} : vector<16x32xf32> to vector<8x32xf32>
    %100 = vector.extract_strided_slice %11 {offsets = [8, 0], sizes = [8, 32], strides = [1, 1]} : vector<16x64xf32> to vector<8x32xf32>
    %101 = tpu.transpose %100, [1, 0] : vector<8x32xf32> -> vector<32x8xf32>
    %cst_41 = arith.constant 0.000000e+00 : f32
    %102 = vector.broadcast %cst_41 : f32 to vector<8x32xf32>
    %103 = vector.extract_strided_slice %99 {offsets = [0, 0], sizes = [8, 8], strides = [1, 1]} : vector<8x32xf32> to vector<8x8xf32>
    %104 = vector.extract_strided_slice %101 {offsets = [0, 0], sizes = [8, 8], strides = [1, 1]} : vector<32x8xf32> to vector<8x8xf32>
    %105 = vector.extract_strided_slice %11 {offsets = [8, 32], sizes = [8, 8], strides = [1, 1]} : vector<16x64xf32> to vector<8x8xf32>
    %cst_42 = arith.constant dense<0.000000e+00> : vector<8x8xf32>
    %106 = tpu.matmul %103, %104, %cst_42 {dimension_numbers = #tpu.dot_dimension_numbers<[1], [0], [0], [1], [0, 0, 1, 1], [], []>} : vector<8x8xf32>, vector<8x8xf32>, vector<8x8xf32> -> vector<8x8xf32>
    %107 = arith.addf %106, %19 : vector<8x8xf32>
    %cst_43 = arith.constant dense<0xFF800000> : vector<8xf32>
    %108 = vector.multi_reduction <maximumf>, %107, %cst_43 [1] : vector<8x8xf32> to vector<8xf32>
    %109 = vector.shape_cast %108 : vector<8xf32> to vector<8x1xf32>
    %110 = vector.broadcast %109 : vector<8x1xf32> to vector<8x8xf32>
    %111 = arith.subf %107, %110 : vector<8x8xf32>
    %112 = math.exp %111 : vector<8x8xf32>
    %cst_44 = arith.constant dense<0.000000e+00> : vector<8xf32>
    %113 = vector.multi_reduction <add>, %112, %cst_44 [1] : vector<8x8xf32> to vector<8xf32>
    %114 = vector.shape_cast %113 : vector<8xf32> to vector<8x1xf32>
    %115 = vector.broadcast %114 : vector<8x1xf32> to vector<8x8xf32>
    %116 = arith.divf %112, %115 : vector<8x8xf32>
    %cst_45 = arith.constant dense<0.000000e+00> : vector<8x8xf32>
    %117 = tpu.matmul %116, %105, %cst_45 {dimension_numbers = #tpu.dot_dimension_numbers<[1], [0], [0], [1], [0, 0, 1, 1], [], []>} : vector<8x8xf32>, vector<8x8xf32>, vector<8x8xf32> -> vector<8x8xf32>
    %118 = vector.extract_strided_slice %12 {offsets = [0, 0], sizes = [8, 32], strides = [1, 1]} : vector<32x32xf32> to vector<8x32xf32>
    %cst_46 = arith.constant dense<0.000000e+00> : vector<8x32xf32>
    %119 = tpu.matmul %117, %118, %cst_46 {dimension_numbers = #tpu.dot_dimension_numbers<[1], [0], [0], [1], [0, 0, 1, 1], [], []>} : vector<8x8xf32>, vector<8x32xf32>, vector<8x32xf32> -> vector<8x32xf32>
    %120 = arith.addf %102, %119 : vector<8x32xf32>
    %121 = vector.extract_strided_slice %99 {offsets = [0, 8], sizes = [8, 8], strides = [1, 1]} : vector<8x32xf32> to vector<8x8xf32>
    %122 = vector.extract_strided_slice %101 {offsets = [8, 0], sizes = [8, 8], strides = [1, 1]} : vector<32x8xf32> to vector<8x8xf32>
    %123 = vector.extract_strided_slice %11 {offsets = [8, 40], sizes = [8, 8], strides = [1, 1]} : vector<16x64xf32> to vector<8x8xf32>
    %cst_47 = arith.constant dense<0.000000e+00> : vector<8x8xf32>
    %124 = tpu.matmul %121, %122, %cst_47 {dimension_numbers = #tpu.dot_dimension_numbers<[1], [0], [0], [1], [0, 0, 1, 1], [], []>} : vector<8x8xf32>, vector<8x8xf32>, vector<8x8xf32> -> vector<8x8xf32>
    %125 = arith.addf %124, %19 : vector<8x8xf32>
    %cst_48 = arith.constant dense<0xFF800000> : vector<8xf32>
    %126 = vector.multi_reduction <maximumf>, %125, %cst_48 [1] : vector<8x8xf32> to vector<8xf32>
    %127 = vector.shape_cast %126 : vector<8xf32> to vector<8x1xf32>
    %128 = vector.broadcast %127 : vector<8x1xf32> to vector<8x8xf32>
    %129 = arith.subf %125, %128 : vector<8x8xf32>
    %130 = math.exp %129 : vector<8x8xf32>
    %cst_49 = arith.constant dense<0.000000e+00> : vector<8xf32>
    %131 = vector.multi_reduction <add>, %130, %cst_49 [1] : vector<8x8xf32> to vector<8xf32>
    %132 = vector.shape_cast %131 : vector<8xf32> to vector<8x1xf32>
    %133 = vector.broadcast %132 : vector<8x1xf32> to vector<8x8xf32>
    %134 = arith.divf %130, %133 : vector<8x8xf32>
    %cst_50 = arith.constant dense<0.000000e+00> : vector<8x8xf32>
    %135 = tpu.matmul %134, %123, %cst_50 {dimension_numbers = #tpu.dot_dimension_numbers<[1], [0], [0], [1], [0, 0, 1, 1], [], []>} : vector<8x8xf32>, vector<8x8xf32>, vector<8x8xf32> -> vector<8x8xf32>
    %136 = vector.extract_strided_slice %12 {offsets = [8, 0], sizes = [8, 32], strides = [1, 1]} : vector<32x32xf32> to vector<8x32xf32>
    %cst_51 = arith.constant dense<0.000000e+00> : vector<8x32xf32>
    %137 = tpu.matmul %135, %136, %cst_51 {dimension_numbers = #tpu.dot_dimension_numbers<[1], [0], [0], [1], [0, 0, 1, 1], [], []>} : vector<8x8xf32>, vector<8x32xf32>, vector<8x32xf32> -> vector<8x32xf32>
    %138 = arith.addf %120, %137 : vector<8x32xf32>
    %139 = vector.extract_strided_slice %99 {offsets = [0, 16], sizes = [8, 8], strides = [1, 1]} : vector<8x32xf32> to vector<8x8xf32>
    %140 = vector.extract_strided_slice %101 {offsets = [16, 0], sizes = [8, 8], strides = [1, 1]} : vector<32x8xf32> to vector<8x8xf32>
    %141 = vector.extract_strided_slice %11 {offsets = [8, 48], sizes = [8, 8], strides = [1, 1]} : vector<16x64xf32> to vector<8x8xf32>
    %cst_52 = arith.constant dense<0.000000e+00> : vector<8x8xf32>
    %142 = tpu.matmul %139, %140, %cst_52 {dimension_numbers = #tpu.dot_dimension_numbers<[1], [0], [0], [1], [0, 0, 1, 1], [], []>} : vector<8x8xf32>, vector<8x8xf32>, vector<8x8xf32> -> vector<8x8xf32>
    %143 = arith.addf %142, %19 : vector<8x8xf32>
    %cst_53 = arith.constant dense<0xFF800000> : vector<8xf32>
    %144 = vector.multi_reduction <maximumf>, %143, %cst_53 [1] : vector<8x8xf32> to vector<8xf32>
    %145 = vector.shape_cast %144 : vector<8xf32> to vector<8x1xf32>
    %146 = vector.broadcast %145 : vector<8x1xf32> to vector<8x8xf32>
    %147 = arith.subf %143, %146 : vector<8x8xf32>
    %148 = math.exp %147 : vector<8x8xf32>
    %cst_54 = arith.constant dense<0.000000e+00> : vector<8xf32>
    %149 = vector.multi_reduction <add>, %148, %cst_54 [1] : vector<8x8xf32> to vector<8xf32>
    %150 = vector.shape_cast %149 : vector<8xf32> to vector<8x1xf32>
    %151 = vector.broadcast %150 : vector<8x1xf32> to vector<8x8xf32>
    %152 = arith.divf %148, %151 : vector<8x8xf32>
    %cst_55 = arith.constant dense<0.000000e+00> : vector<8x8xf32>
    %153 = tpu.matmul %152, %141, %cst_55 {dimension_numbers = #tpu.dot_dimension_numbers<[1], [0], [0], [1], [0, 0, 1, 1], [], []>} : vector<8x8xf32>, vector<8x8xf32>, vector<8x8xf32> -> vector<8x8xf32>
    %154 = vector.extract_strided_slice %12 {offsets = [16, 0], sizes = [8, 32], strides = [1, 1]} : vector<32x32xf32> to vector<8x32xf32>
    %cst_56 = arith.constant dense<0.000000e+00> : vector<8x32xf32>
    %155 = tpu.matmul %153, %154, %cst_56 {dimension_numbers = #tpu.dot_dimension_numbers<[1], [0], [0], [1], [0, 0, 1, 1], [], []>} : vector<8x8xf32>, vector<8x32xf32>, vector<8x32xf32> -> vector<8x32xf32>
    %156 = arith.addf %138, %155 : vector<8x32xf32>
    %157 = vector.extract_strided_slice %99 {offsets = [0, 24], sizes = [8, 8], strides = [1, 1]} : vector<8x32xf32> to vector<8x8xf32>
    %158 = vector.extract_strided_slice %101 {offsets = [24, 0], sizes = [8, 8], strides = [1, 1]} : vector<32x8xf32> to vector<8x8xf32>
    %159 = vector.extract_strided_slice %11 {offsets = [8, 56], sizes = [8, 8], strides = [1, 1]} : vector<16x64xf32> to vector<8x8xf32>
    %cst_57 = arith.constant dense<0.000000e+00> : vector<8x8xf32>
    %160 = tpu.matmul %157, %158, %cst_57 {dimension_numbers = #tpu.dot_dimension_numbers<[1], [0], [0], [1], [0, 0, 1, 1], [], []>} : vector<8x8xf32>, vector<8x8xf32>, vector<8x8xf32> -> vector<8x8xf32>
    %161 = arith.addf %160, %19 : vector<8x8xf32>
    %cst_58 = arith.constant dense<0xFF800000> : vector<8xf32>
    %162 = vector.multi_reduction <maximumf>, %161, %cst_58 [1] : vector<8x8xf32> to vector<8xf32>
    %163 = vector.shape_cast %162 : vector<8xf32> to vector<8x1xf32>
    %164 = vector.broadcast %163 : vector<8x1xf32> to vector<8x8xf32>
    %165 = arith.subf %161, %164 : vector<8x8xf32>
    %166 = math.exp %165 : vector<8x8xf32>
    %cst_59 = arith.constant dense<0.000000e+00> : vector<8xf32>
    %167 = vector.multi_reduction <add>, %166, %cst_59 [1] : vector<8x8xf32> to vector<8xf32>
    %168 = vector.shape_cast %167 : vector<8xf32> to vector<8x1xf32>
    %169 = vector.broadcast %168 : vector<8x1xf32> to vector<8x8xf32>
    %170 = arith.divf %166, %169 : vector<8x8xf32>
    %cst_60 = arith.constant dense<0.000000e+00> : vector<8x8xf32>
    %171 = tpu.matmul %170, %159, %cst_60 {dimension_numbers = #tpu.dot_dimension_numbers<[1], [0], [0], [1], [0, 0, 1, 1], [], []>} : vector<8x8xf32>, vector<8x8xf32>, vector<8x8xf32> -> vector<8x8xf32>
    %172 = vector.extract_strided_slice %12 {offsets = [24, 0], sizes = [8, 32], strides = [1, 1]} : vector<32x32xf32> to vector<8x32xf32>
    %cst_61 = arith.constant dense<0.000000e+00> : vector<8x32xf32>
    %173 = tpu.matmul %171, %172, %cst_61 {dimension_numbers = #tpu.dot_dimension_numbers<[1], [0], [0], [1], [0, 0, 1, 1], [], []>} : vector<8x8xf32>, vector<8x32xf32>, vector<8x32xf32> -> vector<8x32xf32>
    %174 = arith.addf %156, %173 : vector<8x32xf32>
    %175 = vector.broadcast %13 : vector<1x32xf32> to vector<8x32xf32>
    %176 = arith.addf %174, %175 : vector<8x32xf32>
    %c8 = arith.constant 8 : index
    %c0_62 = arith.constant 0 : index
    %177 = vector.load %arg8[%c8, %c0_62] : memref<16x32xf32, #tpu.memory_space<vmem>>, vector<8x32xf32>
    tpu.vector_store %arg8[%c8, %c0_62], %176 {strides = array<i32>} : memref<16x32xf32, #tpu.memory_space<vmem>>, vector<8x32xf32>,
    return
  }
}

</mosaic_0001>

<llo_original>
// kernel: tpu_custom_call.1
$region0: #{tpu_custom_call.1}
  #allocation0 [shape = 'u32[]', space=smem, size = 0x4, offset = 0x4, fixed_abs, tag = 'smem constant byte address 0x4 - core index']
  #allocation1 [shape = 'u32[144,128]{1,0:T(1,128)}', space=vmem, size = 0x12000, scoped, tag = 'internal scratch']
  %s0 = inlined_call_operand.hbm [shape: f32[16,32], index: 0, kind: input, shape index: {}]
  %s1 = inlined_call_operand.hbm [shape: f32[16,32], index: 1, kind: input, shape index: {}]
  %s2 = inlined_call_operand.hbm [shape: f32[32,32], index: 2, kind: input, shape index: {}]
  %s3 = inlined_call_operand.vmem [shape: f32[1,32], index: 3, kind: input, shape index: {}]
  %s4 = inlined_call_operand.hbm [shape: f32[32,64], index: 4, kind: input, shape index: {}]
  %s5 = inlined_call_operand.vmem [shape: f32[1,64], index: 5, kind: input, shape index: {}]
  %s6 = inlined_call_operand.hbm [shape: f32[32,32], index: 6, kind: input, shape index: {}]
  %s7 = inlined_call_operand.vmem [shape: f32[1,32], index: 7, kind: input, shape index: {}]
  %s8 = inlined_call_operand.hbm [shape: f32[16,32], index: 8, kind: output, shape index: {}]
  %s9 = sld [smem:[#allocation0]]
  $region62: #{tpu_custom_call.1} parent=0
    _
  %s11 = ssub.s32 1, %s9
  %s12 = scalar_select 0, %s11, %s9
  $region1: #{tpu_custom_call.1} parent=0
    #allocation2 [shape = 'u8[8192]{0}', space=vmem, size = 0x2000, scoped, tag = 'input window, operand 0, single buffered']
    #allocation3 [shape = 's32[1]{0}', space=sflag, size = 0x4, scoped, tag = 'scoped memory for tpu_custom_call.1']
    #allocation4 [shape = 's32[1]{0}', space=sflag, size = 0x4, scoped, tag = 'scoped memory for tpu_custom_call.1']
    #allocation5 [shape = 'u8[8192]{0}', space=vmem, size = 0x2000, scoped, tag = 'input window, operand 1, single buffered']
    #allocation6 [shape = 's32[1]{0}', space=sflag, size = 0x4, scoped, tag = 'scoped memory for tpu_custom_call.1']
    #allocation7 [shape = 'u8[16384]{0}', space=vmem, size = 0x4000, scoped, tag = 'input window, operand 2, single buffered']
    #allocation8 [shape = 'u8[16384]{0}', space=vmem, size = 0x4000, scoped, tag = 'input window, operand 4, single buffered']
    #allocation9 [shape = 's32[1]{0}', space=sflag, size = 0x4, scoped, tag = 'scoped memory for tpu_custom_call.1']
    #allocation10 [shape = 'u8[16384]{0}', space=vmem, size = 0x4000, scoped, tag = 'input window, operand 6, single buffered']
    #allocation11 [shape = 'u8[8192]{0}', space=vmem, size = 0x2000, scoped, tag = 'output window, operand 0, single buffered']
    %13 = vsyncpa [#allocation3], 0
    %14 = vsyncpa [#allocation6], 0
    %15 = vsyncpa [#allocation9], 0
    %16 = vsyncpa [#allocation4], 0
    // Predicated region
    $region2: #{tpu_custom_call.1} parent=1 // pred_check
      _
    $region3: #{tpu_custom_call.1} parent=1 // pred_check_branch
      %18 = sbr.rel (0) target = $region5
    $region4: #{tpu_custom_call.1} parent=1 // pred_region
      %s20 = ssub.s32 256, 256
      %21 = vsyncadd [#allocation3], %s20
      %s22 = sshll.u32 [#allocation2], 4
      %s23 = int_to_ptr.vmem [resolvable:$true] %s22
      %28 = dma.hbm_to_vmem [thread:$0]  %s0, 256, %s23, [#allocation3], 128, 128, 8
    $region5: #{tpu_custom_call.1} parent=1 // pred_fallthru
      _
    // Predicated region
    $region6: #{tpu_custom_call.1} parent=1 // pred_check
      _
    $region7: #{tpu_custom_call.1} parent=1 // pred_check_branch
      %30 = sbr.rel (0) target = $region9
    $region8: #{tpu_custom_call.1} parent=1 // pred_region
      %s32 = ssub.s32 256, 256
      %33 = vsyncadd [#allocation6], %s32
      %s34 = sshll.u32 [#allocation5], 4
      %s35 = int_to_ptr.vmem [resolvable:$true] %s34
      %40 = dma.hbm_to_vmem [thread:$0]  %s1, 256, %s35, [#allocation6], 128, 128, 8
    $region9: #{tpu_custom_call.1} parent=1 // pred_fallthru
      _
    // Predicated region
    $region10: #{tpu_custom_call.1} parent=1 // pred_check
      _
    $region11: #{tpu_custom_call.1} parent=1 // pred_check_branch
      %42 = sbr.rel (0) target = $region13
    $region12: #{tpu_custom_call.1} parent=1 // pred_region
      %s44 = ssub.s32 512, 512
      %45 = vsyncadd [#allocation6], %s44
      %s46 = sshll.u32 [#allocation7], 4
      %s47 = int_to_ptr.vmem [resolvable:$true] %s46
      %52 = dma.hbm_to_vmem [thread:$0]  %s2, 512, %s47, [#allocation6], 128, 128, 8
    $region13: #{tpu_custom_call.1} parent=1 // pred_fallthru
      _
    // Predicated region
    $region14: #{tpu_custom_call.1} parent=1 // pred_check
      _
    $region15: #{tpu_custom_call.1} parent=1 // pred_check_branch
      %54 = sbr.rel (0) target = $region17
    $region16: #{tpu_custom_call.1} parent=1 // pred_region
      _
    $region17: #{tpu_custom_call.1} parent=1 // pred_fallthru
      _
    // Predicated region
    $region18: #{tpu_custom_call.1} parent=1 // pred_check
      _
    $region19: #{tpu_custom_call.1} parent=1 // pred_check_branch
      %56 = sbr.rel (0) target = $region21
    $region20: #{tpu_custom_call.1} parent=1 // pred_region
      %s58 = ssub.s32 512, 512
      %59 = vsyncadd [#allocation9], %s58
      %s60 = sshll.u32 [#allocation8], 4
      %s61 = int_to_ptr.vmem [resolvable:$true] %s60
      %66 = dma.hbm_to_vmem [thread:$0]  %s4, 512, %s61, [#allocation9], 128, 128, 8
    $region21: #{tpu_custom_call.1} parent=1 // pred_fallthru
      _
    // Predicated region
    $region22: #{tpu_custom_call.1} parent=1 // pred_check
      _
    $region23: #{tpu_custom_call.1} parent=1 // pred_check_branch
      %68 = sbr.rel (0) target = $region25
    $region24: #{tpu_custom_call.1} parent=1 // pred_region
      _
    $region25: #{tpu_custom_call.1} parent=1 // pred_fallthru
      _
    // Predicated region
    $region26: #{tpu_custom_call.1} parent=1 // pred_check
      _
    $region27: #{tpu_custom_call.1} parent=1 // pred_check_branch
      %70 = sbr.rel (0) target = $region29
    $region28: #{tpu_custom_call.1} parent=1 // pred_region
      %s72 = ssub.s32 512, 512
      %73 = vsyncadd [#allocation9], %s72
      %s74 = sshll.u32 [#allocation10], 4
      %s75 = int_to_ptr.vmem [resolvable:$true] %s74
      %80 = dma.hbm_to_vmem [thread:$0]  %s6, 512, %s75, [#allocation9], 128, 128, 8
    $region29: #{tpu_custom_call.1} parent=1 // pred_fallthru
      _
    // Predicated region
    $region30: #{tpu_custom_call.1} parent=1 // pred_check
      _
    $region31: #{tpu_custom_call.1} parent=1 // pred_check_branch
      %82 = sbr.rel (0) target = $region33
    $region32: #{tpu_custom_call.1} parent=1 // pred_region
      _
    $region33: #{tpu_custom_call.1} parent=1 // pred_fallthru
      _
    // Predicated region
    $region34: #{tpu_custom_call.1} parent=1 // pred_check
      _
    $region35: #{tpu_custom_call.1} parent=1 // pred_check_branch
      %84 = sbr.rel (0) target = $region37
    $region36: #{tpu_custom_call.1} parent=1 // pred_region
      %85 = dma.done [#allocation3], 256
    $region37: #{tpu_custom_call.1} parent=1 // pred_fallthru
      _
    // Predicated region
    $region38: #{tpu_custom_call.1} parent=1 // pred_check
      _
    $region39: #{tpu_custom_call.1} parent=1 // pred_check_branch
      %87 = sbr.rel (0) target = $region41
    $region40: #{tpu_custom_call.1} parent=1 // pred_region
      %88 = dma.done [#allocation6], 256
    $region41: #{tpu_custom_call.1} parent=1 // pred_fallthru
      _
    // Predicated region
    $region42: #{tpu_custom_call.1} parent=1 // pred_check
      _
    $region43: #{tpu_custom_call.1} parent=1 // pred_check_branch
      %90 = sbr.rel (0) target = $region45
    $region44: #{tpu_custom_call.1} parent=1 // pred_region
      %91 = dma.done [#allocation6], 512
    $region45: #{tpu_custom_call.1} parent=1 // pred_fallthru
      _
    // Predicated region
    $region46: #{tpu_custom_call.1} parent=1 // pred_check
      _
    $region47: #{tpu_custom_call.1} parent=1 // pred_check_branch
      %93 = sbr.rel (0) target = $region49
    $region48: #{tpu_custom_call.1} parent=1 // pred_region
      %94 = dma.done [#allocation9], 512
    $region49: #{tpu_custom_call.1} parent=1 // pred_fallthru
      _
    // Predicated region
    $region50: #{tpu_custom_call.1} parent=1 // pred_check
      _
    $region51: #{tpu_custom_call.1} parent=1 // pred_check_branch
      %96 = sbr.rel (0) target = $region53
    $region52: #{tpu_custom_call.1} parent=1 // pred_region
      %97 = dma.done [#allocation9], 512
    $region53: #{tpu_custom_call.1} parent=1 // pred_fallthru
      _
    %v98 = vld [vmem:[#allocation2] sm:$0xff]
    %v99 = vld [vmem:[#allocation2 + $0x8] sm:$0xff]
    %v100 = vld [vmem:[#allocation7] sm:$0xff]
    %v101 = vld [vmem:[#allocation7 + $0x8] sm:$0xff]
    %v102 = vld [vmem:[#allocation7 + $0x10] sm:$0xff]
    %v103 = vld [vmem:[#allocation7 + $0x18] sm:$0xff]
    %v104 = vld [vmem:[%s3] sm:$0x1]
    %v106 = vlaneseq
    %v107 = vshrl.u32 %v106, 7
    %v108 = vsub.s32 0, %v107
    %v109 = vrot.slane %v104, %v108
    %vm111 = vcmask 261120
    %v113 = vsel %vm111, %v98, 0
    %v116 = vsel %vm111, %v99, 0
    %118 = vmatprep.subr.mxu0 0.0
    %119 = vmatpush1.msra.mxu0 %v100
    %120 = vmatprep.subr.mxu0 0.0
    %121 = vmatpush1.msra.mxu0 %v101
    %122 = vmatprep.subr.mxu0 0.0
    %123 = vmatpush1.msra.mxu0 %v102
    %124 = vmatprep.subr.mxu0 0.0
    %125 = vmatpush1.msra.mxu0 %v103
    %126 = vmatprep.subr.mxu0 0.0
    %127 = vmatpush1.msra.mxu0 0.0
    %128 = vmatprep.subr.mxu0 0.0
    %129 = vmatpush1.msra.mxu0 0.0
    %130 = vmatprep.subr.mxu0 0.0
    %131 = vmatpush1.msra.mxu0 0.0
    %132 = vmatprep.subr.mxu0 0.0
    %133 = vmatpush1.msra.mxu0 0.0
    %134 = vmatprep.subr.mxu0 0.0
    %135 = vmatpush1.msra.mxu0 0.0
    %136 = vmatprep.subr.mxu0 0.0
    %137 = vmatpush1.msra.mxu0 0.0
    %138 = vmatprep.subr.mxu0 0.0
    %139 = vmatpush1.msra.mxu0 0.0
    %140 = vmatprep.subr.mxu0 0.0
    %141 = vmatpush1.msra.mxu0 0.0
    %142 = vmatprep.subr.mxu0 0.0
    %143 = vmatpush1.msra.mxu0 0.0
    %144 = vmatprep.subr.mxu0 0.0
    %145 = vmatpush1.msra.mxu0 0.0
    %146 = vmatprep.subr.mxu0 0.0
    %147 = vmatpush1.msra.mxu0 0.0
    %148 = vmatprep.subr.mxu0 0.0
    %149 = vmatpush1.msra.mxu0 0.0
    %150 = vmatprep.subr.mxu0 0.0
    %151 = vmatpush1.msra.mxu0 0.0
    %152 = vmatprep.subr.mxu0 0.0
    %153 = vmatpush1.msra.mxu0 0.0
    %154 = vmatprep.subr.mxu0 0.0
    %155 = vmatpush1.msra.mxu0 0.0
    %156 = vmatprep.subr.mxu0 0.0
    %157 = vmatpush1.msra.mxu0 0.0
    %158 = vmatprep.subr.mxu0 0.0
    %159 = vmatpush1.msra.mxu0 0.0
    %160 = vmatprep.subr.mxu0 0.0
    %161 = vmatpush1.msra.mxu0 0.0
    %162 = vmatprep.subr.mxu0 0.0
    %163 = vmatpush1.msra.mxu0 0.0
    %164 = vmatprep.subr.mxu0 0.0
    %165 = vmatpush1.msra.mxu0 0.0
    %166 = vmatprep.subr.mxu0 0.0
    %167 = vmatpush1.msra.mxu0 0.0
    %168 = vmatprep.subr.mxu0 0.0
    %169 = vmatpush1.msra.mxu0 0.0
    %170 = vmatprep.subr.mxu0 0.0
    %171 = vmatpush1.msra.mxu0 0.0
    %172 = vmatprep.subr.mxu0 0.0
    %173 = vmatpush1.msra.mxu0 0.0
    %174 = vmatprep.subr.mxu0 0.0
    %175 = vmatpush1.msra.mxu0 0.0
    %176 = vmatprep.subr.mxu0 0.0
    %177 = vmatpush1.msra.mxu0 0.0
    %178 = vmatprep.subr.mxu0 0.0
    %179 = vmatpush1.msra.mxu0 0.0
    %180 = vmatprep.subr.mxu0 0.0
    %181 = vmatpush1.msra.mxu0 0.0
    %182 = vmatprep.mubr.f32.mxu0 0.0
    %183 = vmatmul.mubr.f32.gmra.mrb[0].mxu0 %v113
    %v184 = vpop.f32.mrb[0].mxu0
    %v185 = vadd.f32 %v109, %v184
    %v186 = vpop.f32.mrb[0].mxu0
    %187 = vmatprep.mubr.f32.mxu0 0.0
    %188 = vmatmul.mubr.f32.gmra.mrb[0].mxu0 %v116
    %v189 = vpop.f32.mrb[0].mxu0
    %v190 = vadd.f32 %v109, %v189
    %v191 = vpop.f32.mrb[0].mxu0
    %192 = vdwg.mxu0
    %v193 = vld [vmem:[#allocation5] sm:$0xff]
    %v194 = vld [vmem:[#allocation5 + $0x8] sm:$0xff]
    %v195 = vld [vmem:[#allocation8] sm:$0xff]
    %v196 = vld [vmem:[#allocation8 + $0x8] sm:$0xff]
    %v197 = vld [vmem:[#allocation8 + $0x10] sm:$0xff]
    %v198 = vld [vmem:[#allocation8 + $0x18] sm:$0xff]
    %v199 = vld [vmem:[%s5] sm:$0x1]
    %v201 = vlaneseq
    %v202 = vshrl.u32 %v201, 7
    %v203 = vsub.s32 0, %v202
    %v204 = vrot.slane %v199, %v203
    %v207 = vsel %vm111, %v193, 0
    %v210 = vsel %vm111, %v194, 0
    %212 = vmatprep.subr.mxu0 0.0
    %213 = vmatpush1.msra.mxu0 %v195
    %214 = vmatprep.subr.mxu0 0.0
    %215 = vmatpush1.msra.mxu0 %v196
    %216 = vmatprep.subr.mxu0 0.0
    %217 = vmatpush1.msra.mxu0 %v197
    %218 = vmatprep.subr.mxu0 0.0
    %219 = vmatpush1.msra.mxu0 %v198
    %220 = vmatprep.subr.mxu0 0.0
    %221 = vmatpush1.msra.mxu0 0.0
    %222 = vmatprep.subr.mxu0 0.0
    %223 = vmatpush1.msra.mxu0 0.0
    %224 = vmatprep.subr.mxu0 0.0
    %225 = vmatpush1.msra.mxu0 0.0
    %226 = vmatprep.subr.mxu0 0.0
    %227 = vmatpush1.msra.mxu0 0.0
    %228 = vmatprep.subr.mxu0 0.0
    %229 = vmatpush1.msra.mxu0 0.0
    %230 = vmatprep.subr.mxu0 0.0
    %231 = vmatpush1.msra.mxu0 0.0
    %232 = vmatprep.subr.mxu0 0.0
    %233 = vmatpush1.msra.mxu0 0.0
    %234 = vmatprep.subr.mxu0 0.0
    %235 = vmatpush1.msra.mxu0 0.0
    %236 = vmatprep.subr.mxu0 0.0
    %237 = vmatpush1.msra.mxu0 0.0
    %238 = vmatprep.subr.mxu0 0.0
    %239 = vmatpush1.msra.mxu0 0.0
    %240 = vmatprep.subr.mxu0 0.0
    %241 = vmatpush1.msra.mxu0 0.0
    %242 = vmatprep.subr.mxu0 0.0
    %243 = vmatpush1.msra.mxu0 0.0
    %244 = vmatprep.subr.mxu0 0.0
    %245 = vmatpush1.msra.mxu0 0.0
    %246 = vmatprep.subr.mxu0 0.0
    %247 = vmatpush1.msra.mxu0 0.0
    %248 = vmatprep.subr.mxu0 0.0
    %249 = vmatpush1.msra.mxu0 0.0
    %250 = vmatprep.subr.mxu0 0.0
    %251 = vmatpush1.msra.mxu0 0.0
    %252 = vmatprep.subr.mxu0 0.0
    %253 = vmatpush1.msra.mxu0 0.0
    %254 = vmatprep.subr.mxu0 0.0
    %255 = vmatpush1.msra.mxu0 0.0
    %256 = vmatprep.subr.mxu0 0.0
    %257 = vmatpush1.msra.mxu0 0.0
    %258 = vmatprep.subr.mxu0 0.0
    %259 = vmatpush1.msra.mxu0 0.0
    %260 = vmatprep.subr.mxu0 0.0
    %261 = vmatpush1.msra.mxu0 0.0
    %262 = vmatprep.subr.mxu0 0.0
    %263 = vmatpush1.msra.mxu0 0.0
    %264 = vmatprep.subr.mxu0 0.0
    %265 = vmatpush1.msra.mxu0 0.0
    %266 = vmatprep.subr.mxu0 0.0
    %267 = vmatpush1.msra.mxu0 0.0
    %268 = vmatprep.subr.mxu0 0.0
    %269 = vmatpush1.msra.mxu0 0.0
    %270 = vmatprep.subr.mxu0 0.0
    %271 = vmatpush1.msra.mxu0 0.0
    %272 = vmatprep.subr.mxu0 0.0
    %273 = vmatpush1.msra.mxu0 0.0
    %274 = vmatprep.subr.mxu0 0.0
    %275 = vmatpush1.msra.mxu0 0.0
    %276 = vmatprep.mubr.f32.mxu0 0.0
    %277 = vmatmul.mubr.f32.gmra.mrb[0].mxu0 %v207
    %v278 = vpop.f32.mrb[0].mxu0
    %v279 = vadd.f32 %v204, %v278
    %v280 = vpop.f32.mrb[0].mxu0
    %281 = vmatprep.mubr.f32.mxu0 0.0
    %282 = vmatmul.mubr.f32.gmra.mrb[0].mxu0 %v210
    %v283 = vpop.f32.mrb[0].mxu0
    %v284 = vadd.f32 %v204, %v283
    %v285 = vpop.f32.mrb[0].mxu0
    %286 = vdwg.mxu0
    %v287 = vld [vmem:[#allocation10] sm:$0xff]
    %v288 = vld [vmem:[#allocation10 + $0x8] sm:$0xff]
    %v289 = vld [vmem:[#allocation10 + $0x10] sm:$0xff]
    %v290 = vld [vmem:[#allocation10 + $0x18] sm:$0xff]
    %v291 = vld [vmem:[%s7] sm:$0x1]
    %v292 = vlaneseq
    %v293 = vshrl.u32 %v292, 7
    %v294 = vlaneseq
    %v295 = vand.u32 %v294, 127
    %vm296 = vcmp.le.s32.totalorder %v295, %v293
    %v297 = vsel %vm296, 0.0, -1e+30
    %vm298 = vcmask 64512
    %v300 = vsel %vm298, %v185, 0
    %v303 = vsel %vm298, %v279, 0
    %305 = vmatprep.subr.mxu0 0.0
    %306 = vmatpush1.xpose.msra.mxu0 %v303
    %307 = vmatprep.subr.mxu0 0.0
    %308 = vmatpush1.xpose.msra.mxu0 0.0
    %309 = vmatprep.subr.mxu0 0.0
    %310 = vmatpush1.xpose.msra.mxu0 0.0
    %311 = vmatprep.subr.mxu0 0.0
    %312 = vmatpush1.xpose.msra.mxu0 0.0
    %313 = vmatprep.subr.mxu0 0.0
    %314 = vmatpush1.xpose.msra.mxu0 0.0
    %315 = vmatprep.subr.mxu0 0.0
    %316 = vmatpush1.xpose.msra.mxu0 0.0
    %317 = vmatprep.subr.mxu0 0.0
    %318 = vmatpush1.xpose.msra.mxu0 0.0
    %319 = vmatprep.subr.mxu0 0.0
    %320 = vmatpush1.xpose.msra.mxu0 0.0
    %321 = vmatprep.subr.mxu0 0.0
    %322 = vmatpush1.xpose.msra.mxu0 0.0
    %323 = vmatprep.subr.mxu0 0.0
    %324 = vmatpush1.xpose.msra.mxu0 0.0
    %325 = vmatprep.subr.mxu0 0.0
    %326 = vmatpush1.xpose.msra.mxu0 0.0
    %327 = vmatprep.subr.mxu0 0.0
    %328 = vmatpush1.xpose.msra.mxu0 0.0
    %329 = vmatprep.subr.mxu0 0.0
    %330 = vmatpush1.xpose.msra.mxu0 0.0
    %331 = vmatprep.subr.mxu0 0.0
    %332 = vmatpush1.xpose.msra.mxu0 0.0
    %333 = vmatprep.subr.mxu0 0.0
    %334 = vmatpush1.xpose.msra.mxu0 0.0
    %335 = vmatprep.subr.mxu0 0.0
    %336 = vmatpush1.xpose.msra.mxu0 0.0
    %337 = vmatprep.subr.mxu0 0.0
    %338 = vmatpush1.xpose.msra.mxu0 0.0
    %339 = vmatprep.subr.mxu0 0.0
    %340 = vmatpush1.xpose.msra.mxu0 0.0
    %341 = vmatprep.subr.mxu0 0.0
    %342 = vmatpush1.xpose.msra.mxu0 0.0
    %343 = vmatprep.subr.mxu0 0.0
    %344 = vmatpush1.xpose.msra.mxu0 0.0
    %345 = vmatprep.subr.mxu0 0.0
    %346 = vmatpush1.xpose.msra.mxu0 0.0
    %347 = vmatprep.subr.mxu0 0.0
    %348 = vmatpush1.xpose.msra.mxu0 0.0
    %349 = vmatprep.subr.mxu0 0.0
    %350 = vmatpush1.xpose.msra.mxu0 0.0
    %351 = vmatprep.subr.mxu0 0.0
    %352 = vmatpush1.xpose.msra.mxu0 0.0
    %353 = vmatprep.subr.mxu0 0.0
    %354 = vmatpush1.xpose.msra.mxu0 0.0
    %355 = vmatprep.subr.mxu0 0.0
    %356 = vmatpush1.xpose.msra.mxu0 0.0
    %357 = vmatprep.subr.mxu0 0.0
    %358 = vmatpush1.xpose.msra.mxu0 0.0
    %359 = vmatprep.subr.mxu0 0.0
    %360 = vmatpush1.xpose.msra.mxu0 0.0
    %361 = vmatprep.subr.mxu0 0.0
    %362 = vmatpush1.xpose.msra.mxu0 0.0
    %363 = vmatprep.subr.mxu0 0.0
    %364 = vmatpush1.xpose.msra.mxu0 0.0
    %365 = vmatprep.subr.mxu0 0.0
    %366 = vmatpush1.xpose.msra.mxu0 0.0
    %367 = vmatprep.subr.mxu0 0.0
    %368 = vmatpush1.xpose.msra.mxu0 0.0
    %369 = vmatprep.mubr.f32.mxu0 0.0
    %370 = vmatmul.mubr.f32.gmra.mrb[0].mxu0 %v300
    %v371 = vpop.f32.mrb[0].mxu0
    %v372 = vadd.f32 %v297, %v371
    %v373 = vpop.f32.mrb[0].mxu0
    %374 = vdwg.mxu0
    %v375 = vsel %vm298, %v372, -inf
    %376 = vmax.xlane.f32.xlu0 %v375
    %v377 = vpop.xlane.xlu0 %376
    %v378 = vsub.f32 %v372, %v377
    %v379 = vmul.f32 %v378, 1.442695
    %v380 = vpow.pop %v379
    %v381 = vsel %vm298, %v380, 0.0
    %382 = vadd.xlane.f32.xlu0 %v381
    %v383 = vpop.xlane.xlu0 %382
    %v384 = vrcp.pop %v383
    %v385 = vmul.f32 %v380, %v384
    %386 = vrot.lane.b32.xlu0 %v279, 96
    %v387 = vpop.permute.xlu0 %386
    %v390 = vsel %vm298, %v385, 0
    %392 = vmatprep.subr.mxu0 0.0
    %393 = vmatpush1.msra.mxu0 %v387
    %394 = vmatprep.subr.mxu0 0.0
    %395 = vmatpush1.msra.mxu0 0.0
    %396 = vmatprep.subr.mxu0 0.0
    %397 = vmatpush1.msra.mxu0 0.0
    %398 = vmatprep.subr.mxu0 0.0
    %399 = vmatpush1.msra.mxu0 0.0
    %400 = vmatprep.subr.mxu0 0.0
    %401 = vmatpush1.msra.mxu0 0.0
    %402 = vmatprep.subr.mxu0 0.0
    %403 = vmatpush1.msra.mxu0 0.0
    %404 = vmatprep.subr.mxu0 0.0
    %405 = vmatpush1.msra.mxu0 0.0
    %406 = vmatprep.subr.mxu0 0.0
    %407 = vmatpush1.msra.mxu0 0.0
    %408 = vmatprep.subr.mxu0 0.0
    %409 = vmatpush1.msra.mxu0 0.0
    %410 = vmatprep.subr.mxu0 0.0
    %411 = vmatpush1.msra.mxu0 0.0
    %412 = vmatprep.subr.mxu0 0.0
    %413 = vmatpush1.msra.mxu0 0.0
    %414 = vmatprep.subr.mxu0 0.0
    %415 = vmatpush1.msra.mxu0 0.0
    %416 = vmatprep.subr.mxu0 0.0
    %417 = vmatpush1.msra.mxu0 0.0
    %418 = vmatprep.subr.mxu0 0.0
    %419 = vmatpush1.msra.mxu0 0.0
    %420 = vmatprep.subr.mxu0 0.0
    %421 = vmatpush1.msra.mxu0 0.0
    %422 = vmatprep.subr.mxu0 0.0
    %423 = vmatpush1.msra.mxu0 0.0
    %424 = vmatprep.subr.mxu0 0.0
    %425 = vmatpush1.msra.mxu0 0.0
    %426 = vmatprep.subr.mxu0 0.0
    %427 = vmatpush1.msra.mxu0 0.0
    %428 = vmatprep.subr.mxu0 0.0
    %429 = vmatpush1.msra.mxu0 0.0
    %430 = vmatprep.subr.mxu0 0.0
    %431 = vmatpush1.msra.mxu0 0.0
    %432 = vmatprep.subr.mxu0 0.0
    %433 = vmatpush1.msra.mxu0 0.0
    %434 = vmatprep.subr.mxu0 0.0
    %435 = vmatpush1.msra.mxu0 0.0
    %436 = vmatprep.subr.mxu0 0.0
    %437 = vmatpush1.msra.mxu0 0.0
    %438 = vmatprep.subr.mxu0 0.0
    %439 = vmatpush1.msra.mxu0 0.0
    %440 = vmatprep.subr.mxu0 0.0
    %441 = vmatpush1.msra.mxu0 0.0
    %442 = vmatprep.subr.mxu0 0.0
    %443 = vmatpush1.msra.mxu0 0.0
    %444 = vmatprep.subr.mxu0 0.0
    %445 = vmatpush1.msra.mxu0 0.0
    %446 = vmatprep.subr.mxu0 0.0
    %447 = vmatpush1.msra.mxu0 0.0
    %448 = vmatprep.subr.mxu0 0.0
    %449 = vmatpush1.msra.mxu0 0.0
    %450 = vmatprep.subr.mxu0 0.0
    %451 = vmatpush1.msra.mxu0 0.0
    %452 = vmatprep.subr.mxu0 0.0
    %453 = vmatpush1.msra.mxu0 0.0
    %454 = vmatprep.subr.mxu0 0.0
    %455 = vmatpush1.msra.mxu0 0.0
    %456 = vmatprep.mubr.f32.mxu0 0.0
    %457 = vmatmul.mubr.f32.gmra.mrb[0].mxu0 %v390
    %v458 = vpop.f32.mrb[0].mxu0
    %v459 = vadd.f32 0.0, %v458
    %v460 = vpop.f32.mrb[0].mxu0
    %461 = vdwg.mxu0
    %462 = vrot.lane.b32.xlu0 %v185, 120
    %v463 = vpop.permute.xlu0 %462
    %464 = vrot.lane.b32.xlu0 %v279, 120
    %v465 = vpop.permute.xlu0 %464
    %v466 = vsel %vm298, %v463, 0
    %v468 = vsel %vm298, %v465, 0
    %470 = vmatprep.subr.mxu0 0.0
    %471 = vmatpush1.xpose.msra.mxu0 %v468
    %472 = vmatprep.subr.mxu0 0.0
    %473 = vmatpush1.xpose.msra.mxu0 0.0
    %474 = vmatprep.subr.mxu0 0.0
    %475 = vmatpush1.xpose.msra.mxu0 0.0
    %476 = vmatprep.subr.mxu0 0.0
    %477 = vmatpush1.xpose.msra.mxu0 0.0
    %478 = vmatprep.subr.mxu0 0.0
    %479 = vmatpush1.xpose.msra.mxu0 0.0
    %480 = vmatprep.subr.mxu0 0.0
    %481 = vmatpush1.xpose.msra.mxu0 0.0
    %482 = vmatprep.subr.mxu0 0.0
    %483 = vmatpush1.xpose.msra.mxu0 0.0
    %484 = vmatprep.subr.mxu0 0.0
    %485 = vmatpush1.xpose.msra.mxu0 0.0
    %486 = vmatprep.subr.mxu0 0.0
    %487 = vmatpush1.xpose.msra.mxu0 0.0
    %488 = vmatprep.subr.mxu0 0.0
    %489 = vmatpush1.xpose.msra.mxu0 0.0
    %490 = vmatprep.subr.mxu0 0.0
    %491 = vmatpush1.xpose.msra.mxu0 0.0
    %492 = vmatprep.subr.mxu0 0.0
    %493 = vmatpush1.xpose.msra.mxu0 0.0
    %494 = vmatprep.subr.mxu0 0.0
    %495 = vmatpush1.xpose.msra.mxu0 0.0
    %496 = vmatprep.subr.mxu0 0.0
    %497 = vmatpush1.xpose.msra.mxu0 0.0
    %498 = vmatprep.subr.mxu0 0.0
    %499 = vmatpush1.xpose.msra.mxu0 0.0
    %500 = vmatprep.subr.mxu0 0.0
    %501 = vmatpush1.xpose.msra.mxu0 0.0
    %502 = vmatprep.subr.mxu0 0.0
    %503 = vmatpush1.xpose.msra.mxu0 0.0
    %504 = vmatprep.subr.mxu0 0.0
    %505 = vmatpush1.xpose.msra.mxu0 0.0
    %506 = vmatprep.subr.mxu0 0.0
    %507 = vmatpush1.xpose.msra.mxu0 0.0
    %508 = vmatprep.subr.mxu0 0.0
    %509 = vmatpush1.xpose.msra.mxu0 0.0
    %510 = vmatprep.subr.mxu0 0.0
    %511 = vmatpush1.xpose.msra.mxu0 0.0
    %512 = vmatprep.subr.mxu0 0.0
    %513 = vmatpush1.xpose.msra.mxu0 0.0
    %514 = vmatprep.subr.mxu0 0.0
    %515 = vmatpush1.xpose.msra.mxu0 0.0
    %516 = vmatprep.subr.mxu0 0.0
    %517 = vmatpush1.xpose.msra.mxu0 0.0
    %518 = vmatprep.subr.mxu0 0.0
    %519 = vmatpush1.xpose.msra.mxu0 0.0
    %520 = vmatprep.subr.mxu0 0.0
    %521 = vmatpush1.xpose.msra.mxu0 0.0
    %522 = vmatprep.subr.mxu0 0.0
    %523 = vmatpush1.xpose.msra.mxu0 0.0
    %524 = vmatprep.subr.mxu0 0.0
    %525 = vmatpush1.xpose.msra.mxu0 0.0
    %526 = vmatprep.subr.mxu0 0.0
    %527 = vmatpush1.xpose.msra.mxu0 0.0
    %528 = vmatprep.subr.mxu0 0.0
    %529 = vmatpush1.xpose.msra.mxu0 0.0
    %530 = vmatprep.subr.mxu0 0.0
    %531 = vmatpush1.xpose.msra.mxu0 0.0
    %532 = vmatprep.subr.mxu0 0.0
    %533 = vmatpush1.xpose.msra.mxu0 0.0
    %534 = vmatprep.mubr.f32.mxu0 0.0
    %535 = vmatmul.mubr.f32.gmra.mrb[0].mxu0 %v466
    %v536 = vpop.f32.mrb[0].mxu0
    %v537 = vadd.f32 %v297, %v536
    %v538 = vpop.f32.mrb[0].mxu0
    %539 = vdwg.mxu0
    %v540 = vsel %vm298, %v537, -inf
    %541 = vmax.xlane.f32.xlu0 %v540
    %v542 = vpop.xlane.xlu0 %541
    %v543 = vsub.f32 %v537, %v542
    %v544 = vmul.f32 %v543, 1.442695
    %v545 = vpow.pop %v544
    %v546 = vsel %vm298, %v545, 0.0
    %547 = vadd.xlane.f32.xlu0 %v546
    %v548 = vpop.xlane.xlu0 %547
    %v549 = vrcp.pop %v548
    %v550 = vmul.f32 %v545, %v549
    %551 = vrot.lane.b32.xlu0 %v279, 88
    %v552 = vpop.permute.xlu0 %551
    %v555 = vsel %vm298, %v550, 0
    %557 = vmatprep.subr.mxu0 0.0
    %558 = vmatpush1.msra.mxu0 %v552
    %559 = vmatprep.subr.mxu0 0.0
    %560 = vmatpush1.msra.mxu0 0.0
    %561 = vmatprep.subr.mxu0 0.0
    %562 = vmatpush1.msra.mxu0 0.0
    %563 = vmatprep.subr.mxu0 0.0
    %564 = vmatpush1.msra.mxu0 0.0
    %565 = vmatprep.subr.mxu0 0.0
    %566 = vmatpush1.msra.mxu0 0.0
    %567 = vmatprep.subr.mxu0 0.0
    %568 = vmatpush1.msra.mxu0 0.0
    %569 = vmatprep.subr.mxu0 0.0
    %570 = vmatpush1.msra.mxu0 0.0
    %571 = vmatprep.subr.mxu0 0.0
    %572 = vmatpush1.msra.mxu0 0.0
    %573 = vmatprep.subr.mxu0 0.0
    %574 = vmatpush1.msra.mxu0 0.0
    %575 = vmatprep.subr.mxu0 0.0
    %576 = vmatpush1.msra.mxu0 0.0
    %577 = vmatprep.subr.mxu0 0.0
    %578 = vmatpush1.msra.mxu0 0.0
    %579 = vmatprep.subr.mxu0 0.0
    %580 = vmatpush1.msra.mxu0 0.0
    %581 = vmatprep.subr.mxu0 0.0
    %582 = vmatpush1.msra.mxu0 0.0
    %583 = vmatprep.subr.mxu0 0.0
    %584 = vmatpush1.msra.mxu0 0.0
    %585 = vmatprep.subr.mxu0 0.0
    %586 = vmatpush1.msra.mxu0 0.0
    %587 = vmatprep.subr.mxu0 0.0
    %588 = vmatpush1.msra.mxu0 0.0
    %589 = vmatprep.subr.mxu0 0.0
    %590 = vmatpush1.msra.mxu0 0.0
    %591 = vmatprep.subr.mxu0 0.0
    %592 = vmatpush1.msra.mxu0 0.0
    %593 = vmatprep.subr.mxu0 0.0
    %594 = vmatpush1.msra.mxu0 0.0
    %595 = vmatprep.subr.mxu0 0.0
    %596 = vmatpush1.msra.mxu0 0.0
    %597 = vmatprep.subr.mxu0 0.0
    %598 = vmatpush1.msra.mxu0 0.0
    %599 = vmatprep.subr.mxu0 0.0
    %600 = vmatpush1.msra.mxu0 0.0
    %601 = vmatprep.subr.mxu0 0.0
    %602 = vmatpush1.msra.mxu0 0.0
    %603 = vmatprep.subr.mxu0 0.0
    %604 = vmatpush1.msra.mxu0 0.0
    %605 = vmatprep.subr.mxu0 0.0
    %606 = vmatpush1.msra.mxu0 0.0
    %607 = vmatprep.subr.mxu0 0.0
    %608 = vmatpush1.msra.mxu0 0.0
    %609 = vmatprep.subr.mxu0 0.0
    %610 = vmatpush1.msra.mxu0 0.0
    %611 = vmatprep.subr.mxu0 0.0
    %612 = vmatpush1.msra.mxu0 0.0
    %613 = vmatprep.subr.mxu0 0.0
    %614 = vmatpush1.msra.mxu0 0.0
    %615 = vmatprep.subr.mxu0 0.0
    %616 = vmatpush1.msra.mxu0 0.0
    %617 = vmatprep.subr.mxu0 0.0
    %618 = vmatpush1.msra.mxu0 0.0
    %619 = vmatprep.subr.mxu0 0.0
    %620 = vmatpush1.msra.mxu0 0.0
    %621 = vmatprep.mubr.f32.mxu0 0.0
    %622 = vmatmul.mubr.f32.gmra.mrb[0].mxu0 %v555
    %v623 = vpop.f32.mrb[0].mxu0
    %v624 = vadd.f32 0.0, %v623
    %v625 = vpop.f32.mrb[0].mxu0
    %626 = vdwg.mxu0
    %v628 = vsel %vm298, %v624, 0
    %630 = vmatprep.subr.mxu0 0.0
    %631 = vmatpush1.msra.mxu0 %v288
    %632 = vmatprep.subr.mxu0 0.0
    %633 = vmatpush1.msra.mxu0 0.0
    %634 = vmatprep.subr.mxu0 0.0
    %635 = vmatpush1.msra.mxu0 0.0
    %636 = vmatprep.subr.mxu0 0.0
    %637 = vmatpush1.msra.mxu0 0.0
    %638 = vmatprep.subr.mxu0 0.0
    %639 = vmatpush1.msra.mxu0 0.0
    %640 = vmatprep.subr.mxu0 0.0
    %641 = vmatpush1.msra.mxu0 0.0
    %642 = vmatprep.subr.mxu0 0.0
    %643 = vmatpush1.msra.mxu0 0.0
    %644 = vmatprep.subr.mxu0 0.0
    %645 = vmatpush1.msra.mxu0 0.0
    %646 = vmatprep.subr.mxu0 0.0
    %647 = vmatpush1.msra.mxu0 0.0
    %648 = vmatprep.subr.mxu0 0.0
    %649 = vmatpush1.msra.mxu0 0.0
    %650 = vmatprep.subr.mxu0 0.0
    %651 = vmatpush1.msra.mxu0 0.0
    %652 = vmatprep.subr.mxu0 0.0
    %653 = vmatpush1.msra.mxu0 0.0
    %654 = vmatprep.subr.mxu0 0.0
    %655 = vmatpush1.msra.mxu0 0.0
    %656 = vmatprep.subr.mxu0 0.0
    %657 = vmatpush1.msra.mxu0 0.0
    %658 = vmatprep.subr.mxu0 0.0
    %659 = vmatpush1.msra.mxu0 0.0
    %660 = vmatprep.subr.mxu0 0.0
    %661 = vmatpush1.msra.mxu0 0.0
    %662 = vmatprep.subr.mxu0 0.0
    %663 = vmatpush1.msra.mxu0 0.0
    %664 = vmatprep.subr.mxu0 0.0
    %665 = vmatpush1.msra.mxu0 0.0
    %666 = vmatprep.subr.mxu0 0.0
    %667 = vmatpush1.msra.mxu0 0.0
    %668 = vmatprep.subr.mxu0 0.0
    %669 = vmatpush1.msra.mxu0 0.0
    %670 = vmatprep.subr.mxu0 0.0
    %671 = vmatpush1.msra.mxu0 0.0
    %672 = vmatprep.subr.mxu0 0.0
    %673 = vmatpush1.msra.mxu0 0.0
    %674 = vmatprep.subr.mxu0 0.0
    %675 = vmatpush1.msra.mxu0 0.0
    %676 = vmatprep.subr.mxu0 0.0
    %677 = vmatpush1.msra.mxu0 0.0
    %678 = vmatprep.subr.mxu0 0.0
    %679 = vmatpush1.msra.mxu0 0.0
    %680 = vmatprep.subr.mxu0 0.0
    %681 = vmatpush1.msra.mxu0 0.0
    %682 = vmatprep.subr.mxu0 0.0
    %683 = vmatpush1.msra.mxu0 0.0
    %684 = vmatprep.subr.mxu0 0.0
    %685 = vmatpush1.msra.mxu0 0.0
    %686 = vmatprep.subr.mxu0 0.0
    %687 = vmatpush1.msra.mxu0 0.0
    %688 = vmatprep.subr.mxu0 0.0
    %689 = vmatpush1.msra.mxu0 0.0
    %690 = vmatprep.subr.mxu0 0.0
    %691 = vmatpush1.msra.mxu0 0.0
    %692 = vmatprep.subr.mxu0 0.0
    %693 = vmatpush1.msra.mxu0 0.0
    %694 = vmatprep.mubr.f32.mxu0 0.0
    %695 = vmatmul.mubr.f32.gmra.mrb[0].mxu0 %v628
    %v696 = vpop.f32.mrb[0].mxu0
    %v697 = vadd.f32 0.0, %v696
    %v698 = vpop.f32.mrb[0].mxu0
    %699 = vdwg.mxu0
    %v701 = vsel %vm298, %v459, 0
    %703 = vmatprep.subr.mxu0 0.0
    %704 = vmatpush1.msra.mxu0 %v287
    %705 = vmatprep.subr.mxu0 0.0
    %706 = vmatpush1.msra.mxu0 0.0
    %707 = vmatprep.subr.mxu0 0.0
    %708 = vmatpush1.msra.mxu0 0.0
    %709 = vmatprep.subr.mxu0 0.0
    %710 = vmatpush1.msra.mxu0 0.0
    %711 = vmatprep.subr.mxu0 0.0
    %712 = vmatpush1.msra.mxu0 0.0
    %713 = vmatprep.subr.mxu0 0.0
    %714 = vmatpush1.msra.mxu0 0.0
    %715 = vmatprep.subr.mxu0 0.0
    %716 = vmatpush1.msra.mxu0 0.0
    %717 = vmatprep.subr.mxu0 0.0
    %718 = vmatpush1.msra.mxu0 0.0
    %719 = vmatprep.subr.mxu0 0.0
    %720 = vmatpush1.msra.mxu0 0.0
    %721 = vmatprep.subr.mxu0 0.0
    %722 = vmatpush1.msra.mxu0 0.0
    %723 = vmatprep.subr.mxu0 0.0
    %724 = vmatpush1.msra.mxu0 0.0
    %725 = vmatprep.subr.mxu0 0.0
    %726 = vmatpush1.msra.mxu0 0.0
    %727 = vmatprep.subr.mxu0 0.0
    %728 = vmatpush1.msra.mxu0 0.0
    %729 = vmatprep.subr.mxu0 0.0
    %730 = vmatpush1.msra.mxu0 0.0
    %731 = vmatprep.subr.mxu0 0.0
    %732 = vmatpush1.msra.mxu0 0.0
    %733 = vmatprep.subr.mxu0 0.0
    %734 = vmatpush1.msra.mxu0 0.0
    %735 = vmatprep.subr.mxu0 0.0
    %736 = vmatpush1.msra.mxu0 0.0
    %737 = vmatprep.subr.mxu0 0.0
    %738 = vmatpush1.msra.mxu0 0.0
    %739 = vmatprep.subr.mxu0 0.0
    %740 = vmatpush1.msra.mxu0 0.0
    %741 = vmatprep.subr.mxu0 0.0
    %742 = vmatpush1.msra.mxu0 0.0
    %743 = vmatprep.subr.mxu0 0.0
    %744 = vmatpush1.msra.mxu0 0.0
    %745 = vmatprep.subr.mxu0 0.0
    %746 = vmatpush1.msra.mxu0 0.0
    %747 = vmatprep.subr.mxu0 0.0
    %748 = vmatpush1.msra.mxu0 0.0
    %749 = vmatprep.subr.mxu0 0.0
    %750 = vmatpush1.msra.mxu0 0.0
    %751 = vmatprep.subr.mxu0 0.0
    %752 = vmatpush1.msra.mxu0 0.0
    %753 = vmatprep.subr.mxu0 0.0
    %754 = vmatpush1.msra.mxu0 0.0
    %755 = vmatprep.subr.mxu0 0.0
    %756 = vmatpush1.msra.mxu0 0.0
    %757 = vmatprep.subr.mxu0 0.0
    %758 = vmatpush1.msra.mxu0 0.0
    %759 = vmatprep.subr.mxu0 0.0
    %760 = vmatpush1.msra.mxu0 0.0
    %761 = vmatprep.subr.mxu0 0.0
    %762 = vmatpush1.msra.mxu0 0.0
    %763 = vmatprep.subr.mxu0 0.0
    %764 = vmatpush1.msra.mxu0 0.0
    %765 = vmatprep.subr.mxu0 0.0
    %766 = vmatpush1.msra.mxu0 0.0
    %767 = vmatprep.mubr.f32.mxu0 0.0
    %768 = vmatmul.mubr.f32.gmra.mrb[0].mxu0 %v701
    %v769 = vpop.f32.mrb[0].mxu0
    %v770 = vadd.f32 %v697, %v769
    %v771 = vpop.f32.mrb[0].mxu0
    %772 = vdwg.mxu0
    %773 = vrot.lane.b32.xlu0 %v185, 112
    %v774 = vpop.permute.xlu0 %773
    %775 = vrot.lane.b32.xlu0 %v279, 112
    %v776 = vpop.permute.xlu0 %775
    %v777 = vsel %vm298, %v774, 0
    %v779 = vsel %vm298, %v776, 0
    %781 = vmatprep.subr.mxu0 0.0
    %782 = vmatpush1.xpose.msra.mxu0 %v779
    %783 = vmatprep.subr.mxu0 0.0
    %784 = vmatpush1.xpose.msra.mxu0 0.0
    %785 = vmatprep.subr.mxu0 0.0
    %786 = vmatpush1.xpose.msra.mxu0 0.0
    %787 = vmatprep.subr.mxu0 0.0
    %788 = vmatpush1.xpose.msra.mxu0 0.0
    %789 = vmatprep.subr.mxu0 0.0
    %790 = vmatpush1.xpose.msra.mxu0 0.0
    %791 = vmatprep.subr.mxu0 0.0
    %792 = vmatpush1.xpose.msra.mxu0 0.0
    %793 = vmatprep.subr.mxu0 0.0
    %794 = vmatpush1.xpose.msra.mxu0 0.0
    %795 = vmatprep.subr.mxu0 0.0
    %796 = vmatpush1.xpose.msra.mxu0 0.0
    %797 = vmatprep.subr.mxu0 0.0
    %798 = vmatpush1.xpose.msra.mxu0 0.0
    %799 = vmatprep.subr.mxu0 0.0
    %800 = vmatpush1.xpose.msra.mxu0 0.0
    %801 = vmatprep.subr.mxu0 0.0
    %802 = vmatpush1.xpose.msra.mxu0 0.0
    %803 = vmatprep.subr.mxu0 0.0
    %804 = vmatpush1.xpose.msra.mxu0 0.0
    %805 = vmatprep.subr.mxu0 0.0
    %806 = vmatpush1.xpose.msra.mxu0 0.0
    %807 = vmatprep.subr.mxu0 0.0
    %808 = vmatpush1.xpose.msra.mxu0 0.0
    %809 = vmatprep.subr.mxu0 0.0
    %810 = vmatpush1.xpose.msra.mxu0 0.0
    %811 = vmatprep.subr.mxu0 0.0
    %812 = vmatpush1.xpose.msra.mxu0 0.0
    %813 = vmatprep.subr.mxu0 0.0
    %814 = vmatpush1.xpose.msra.mxu0 0.0
    %815 = vmatprep.subr.mxu0 0.0
    %816 = vmatpush1.xpose.msra.mxu0 0.0
    %817 = vmatprep.subr.mxu0 0.0
    %818 = vmatpush1.xpose.msra.mxu0 0.0
    %819 = vmatprep.subr.mxu0 0.0
    %820 = vmatpush1.xpose.msra.mxu0 0.0
    %821 = vmatprep.subr.mxu0 0.0
    %822 = vmatpush1.xpose.msra.mxu0 0.0
    %823 = vmatprep.subr.mxu0 0.0
    %824 = vmatpush1.xpose.msra.mxu0 0.0
    %825 = vmatprep.subr.mxu0 0.0
    %826 = vmatpush1.xpose.msra.mxu0 0.0
    %827 = vmatprep.subr.mxu0 0.0
    %828 = vmatpush1.xpose.msra.mxu0 0.0
    %829 = vmatprep.subr.mxu0 0.0
    %830 = vmatpush1.xpose.msra.mxu0 0.0
    %831 = vmatprep.subr.mxu0 0.0
    %832 = vmatpush1.xpose.msra.mxu0 0.0
    %833 = vmatprep.subr.mxu0 0.0
    %834 = vmatpush1.xpose.msra.mxu0 0.0
    %835 = vmatprep.subr.mxu0 0.0
    %836 = vmatpush1.xpose.msra.mxu0 0.0
    %837 = vmatprep.subr.mxu0 0.0
    %838 = vmatpush1.xpose.msra.mxu0 0.0
    %839 = vmatprep.subr.mxu0 0.0
    %840 = vmatpush1.xpose.msra.mxu0 0.0
    %841 = vmatprep.subr.mxu0 0.0
    %842 = vmatpush1.xpose.msra.mxu0 0.0
    %843 = vmatprep.subr.mxu0 0.0
    %844 = vmatpush1.xpose.msra.mxu0 0.0
    %845 = vmatprep.mubr.f32.mxu0 0.0
    %846 = vmatmul.mubr.f32.gmra.mrb[0].mxu0 %v777
    %v847 = vpop.f32.mrb[0].mxu0
    %v848 = vadd.f32 %v297, %v847
    %v849 = vpop.f32.mrb[0].mxu0
    %850 = vdwg.mxu0
    %v851 = vsel %vm298, %v848, -inf
    %852 = vmax.xlane.f32.xlu0 %v851
    %v853 = vpop.xlane.xlu0 %852
    %v854 = vsub.f32 %v848, %v853
    %v855 = vmul.f32 %v854, 1.442695
    %v856 = vpow.pop %v855
    %v857 = vsel %vm298, %v856, 0.0
    %858 = vadd.xlane.f32.xlu0 %v857
    %v859 = vpop.xlane.xlu0 %858
    %v860 = vrcp.pop %v859
    %v861 = vmul.f32 %v856, %v860
    %862 = vrot.lane.b32.xlu0 %v279, 80
    %v863 = vpop.permute.xlu0 %862
    %v866 = vsel %vm298, %v861, 0
    %868 = vmatprep.subr.mxu0 0.0
    %869 = vmatpush1.msra.mxu0 %v863
    %870 = vmatprep.subr.mxu0 0.0
    %871 = vmatpush1.msra.mxu0 0.0
    %872 = vmatprep.subr.mxu0 0.0
    %873 = vmatpush1.msra.mxu0 0.0
    %874 = vmatprep.subr.mxu0 0.0
    %875 = vmatpush1.msra.mxu0 0.0
    %876 = vmatprep.subr.mxu0 0.0
    %877 = vmatpush1.msra.mxu0 0.0
    %878 = vmatprep.subr.mxu0 0.0
    %879 = vmatpush1.msra.mxu0 0.0
    %880 = vmatprep.subr.mxu0 0.0
    %881 = vmatpush1.msra.mxu0 0.0
    %882 = vmatprep.subr.mxu0 0.0
    %883 = vmatpush1.msra.mxu0 0.0
    %884 = vmatprep.subr.mxu0 0.0
    %885 = vmatpush1.msra.mxu0 0.0
    %886 = vmatprep.subr.mxu0 0.0
    %887 = vmatpush1.msra.mxu0 0.0
    %888 = vmatprep.subr.mxu0 0.0
    %889 = vmatpush1.msra.mxu0 0.0
    %890 = vmatprep.subr.mxu0 0.0
    %891 = vmatpush1.msra.mxu0 0.0
    %892 = vmatprep.subr.mxu0 0.0
    %893 = vmatpush1.msra.mxu0 0.0
    %894 = vmatprep.subr.mxu0 0.0
    %895 = vmatpush1.msra.mxu0 0.0
    %896 = vmatprep.subr.mxu0 0.0
    %897 = vmatpush1.msra.mxu0 0.0
    %898 = vmatprep.subr.mxu0 0.0
    %899 = vmatpush1.msra.mxu0 0.0
    %900 = vmatprep.subr.mxu0 0.0
    %901 = vmatpush1.msra.mxu0 0.0
    %902 = vmatprep.subr.mxu0 0.0
    %903 = vmatpush1.msra.mxu0 0.0
    %904 = vmatprep.subr.mxu0 0.0
    %905 = vmatpush1.msra.mxu0 0.0
    %906 = vmatprep.subr.mxu0 0.0
    %907 = vmatpush1.msra.mxu0 0.0
    %908 = vmatprep.subr.mxu0 0.0
    %909 = vmatpush1.msra.mxu0 0.0
    %910 = vmatprep.subr.mxu0 0.0
    %911 = vmatpush1.msra.mxu0 0.0
    %912 = vmatprep.subr.mxu0 0.0
    %913 = vmatpush1.msra.mxu0 0.0
    %914 = vmatprep.subr.mxu0 0.0
    %915 = vmatpush1.msra.mxu0 0.0
    %916 = vmatprep.subr.mxu0 0.0
    %917 = vmatpush1.msra.mxu0 0.0
    %918 = vmatprep.subr.mxu0 0.0
    %919 = vmatpush1.msra.mxu0 0.0
    %920 = vmatprep.subr.mxu0 0.0
    %921 = vmatpush1.msra.mxu0 0.0
    %922 = vmatprep.subr.mxu0 0.0
    %923 = vmatpush1.msra.mxu0 0.0
    %924 = vmatprep.subr.mxu0 0.0
    %925 = vmatpush1.msra.mxu0 0.0
    %926 = vmatprep.subr.mxu0 0.0
    %927 = vmatpush1.msra.mxu0 0.0
    %928 = vmatprep.subr.mxu0 0.0
    %929 = vmatpush1.msra.mxu0 0.0
    %930 = vmatprep.subr.mxu0 0.0
    %931 = vmatpush1.msra.mxu0 0.0
    %932 = vmatprep.mubr.f32.mxu0 0.0
    %933 = vmatmul.mubr.f32.gmra.mrb[0].mxu0 %v866
    %v934 = vpop.f32.mrb[0].mxu0
    %v935 = vadd.f32 0.0, %v934
    %v936 = vpop.f32.mrb[0].mxu0
    %937 = vdwg.mxu0
    %v939 = vsel %vm298, %v935, 0
    %941 = vmatprep.subr.mxu0 0.0
    %942 = vmatpush1.msra.mxu0 %v289
    %943 = vmatprep.subr.mxu0 0.0
    %944 = vmatpush1.msra.mxu0 0.0
    %945 = vmatprep.subr.mxu0 0.0
    %946 = vmatpush1.msra.mxu0 0.0
    %947 = vmatprep.subr.mxu0 0.0
    %948 = vmatpush1.msra.mxu0 0.0
    %949 = vmatprep.subr.mxu0 0.0
    %950 = vmatpush1.msra.mxu0 0.0
    %951 = vmatprep.subr.mxu0 0.0
    %952 = vmatpush1.msra.mxu0 0.0
    %953 = vmatprep.subr.mxu0 0.0
    %954 = vmatpush1.msra.mxu0 0.0
    %955 = vmatprep.subr.mxu0 0.0
    %956 = vmatpush1.msra.mxu0 0.0
    %957 = vmatprep.subr.mxu0 0.0
    %958 = vmatpush1.msra.mxu0 0.0
    %959 = vmatprep.subr.mxu0 0.0
    %960 = vmatpush1.msra.mxu0 0.0
    %961 = vmatprep.subr.mxu0 0.0
    %962 = vmatpush1.msra.mxu0 0.0
    %963 = vmatprep.subr.mxu0 0.0
    %964 = vmatpush1.msra.mxu0 0.0
    %965 = vmatprep.subr.mxu0 0.0
    %966 = vmatpush1.msra.mxu0 0.0
    %967 = vmatprep.subr.mxu0 0.0
    %968 = vmatpush1.msra.mxu0 0.0
    %969 = vmatprep.subr.mxu0 0.0
    %970 = vmatpush1.msra.mxu0 0.0
    %971 = vmatprep.subr.mxu0 0.0
    %972 = vmatpush1.msra.mxu0 0.0
    %973 = vmatprep.subr.mxu0 0.0
    %974 = vmatpush1.msra.mxu0 0.0
    %975 = vmatprep.subr.mxu0 0.0
    %976 = vmatpush1.msra.mxu0 0.0
    %977 = vmatprep.subr.mxu0 0.0
    %978 = vmatpush1.msra.mxu0 0.0
    %979 = vmatprep.subr.mxu0 0.0
    %980 = vmatpush1.msra.mxu0 0.0
    %981 = vmatprep.subr.mxu0 0.0
    %982 = vmatpush1.msra.mxu0 0.0
    %983 = vmatprep.subr.mxu0 0.0
    %984 = vmatpush1.msra.mxu0 0.0
    %985 = vmatprep.subr.mxu0 0.0
    %986 = vmatpush1.msra.mxu0 0.0
    %987 = vmatprep.subr.mxu0 0.0
    %988 = vmatpush1.msra.mxu0 0.0
    %989 = vmatprep.subr.mxu0 0.0
    %990 = vmatpush1.msra.mxu0 0.0
    %991 = vmatprep.subr.mxu0 0.0
    %992 = vmatpush1.msra.mxu0 0.0
    %993 = vmatprep.subr.mxu0 0.0
    %994 = vmatpush1.msra.mxu0 0.0
    %995 = vmatprep.subr.mxu0 0.0
    %996 = vmatpush1.msra.mxu0 0.0
    %997 = vmatprep.subr.mxu0 0.0
    %998 = vmatpush1.msra.mxu0 0.0
    %999 = vmatprep.subr.mxu0 0.0
    %1000 = vmatpush1.msra.mxu0 0.0
    %1001 = vmatprep.subr.mxu0 0.0
    %1002 = vmatpush1.msra.mxu0 0.0
    %1003 = vmatprep.subr.mxu0 0.0
    %1004 = vmatpush1.msra.mxu0 0.0
    %1005 = vmatprep.mubr.f32.mxu0 0.0
    %1006 = vmatmul.mubr.f32.gmra.mrb[0].mxu0 %v939
    %v1007 = vpop.f32.mrb[0].mxu0
    %v1008 = vadd.f32 0.0, %v1007
    %v1009 = vpop.f32.mrb[0].mxu0
    %1010 = vdwg.mxu0
    %v1011 = vadd.f32 %v770, %v1008
    %1012 = vrot.lane.b32.xlu0 %v185, 104
    %v1013 = vpop.permute.xlu0 %1012
    %1014 = vrot.lane.b32.xlu0 %v279, 104
    %v1015 = vpop.permute.xlu0 %1014
    %v1016 = vsel %vm298, %v1013, 0
    %v1018 = vsel %vm298, %v1015, 0
    %1020 = vmatprep.subr.mxu0 0.0
    %1021 = vmatpush1.xpose.msra.mxu0 %v1018
    %1022 = vmatprep.subr.mxu0 0.0
    %1023 = vmatpush1.xpose.msra.mxu0 0.0
    %1024 = vmatprep.subr.mxu0 0.0
    %1025 = vmatpush1.xpose.msra.mxu0 0.0
    %1026 = vmatprep.subr.mxu0 0.0
    %1027 = vmatpush1.xpose.msra.mxu0 0.0
    %1028 = vmatprep.subr.mxu0 0.0
    %1029 = vmatpush1.xpose.msra.mxu0 0.0
    %1030 = vmatprep.subr.mxu0 0.0
    %1031 = vmatpush1.xpose.msra.mxu0 0.0
    %1032 = vmatprep.subr.mxu0 0.0
    %1033 = vmatpush1.xpose.msra.mxu0 0.0
    %1034 = vmatprep.subr.mxu0 0.0
    %1035 = vmatpush1.xpose.msra.mxu0 0.0
    %1036 = vmatprep.subr.mxu0 0.0
    %1037 = vmatpush1.xpose.msra.mxu0 0.0
    %1038 = vmatprep.subr.mxu0 0.0
    %1039 = vmatpush1.xpose.msra.mxu0 0.0
    %1040 = vmatprep.subr.mxu0 0.0
    %1041 = vmatpush1.xpose.msra.mxu0 0.0
    %1042 = vmatprep.subr.mxu0 0.0
    %1043 = vmatpush1.xpose.msra.mxu0 0.0
    %1044 = vmatprep.subr.mxu0 0.0
    %1045 = vmatpush1.xpose.msra.mxu0 0.0
    %1046 = vmatprep.subr.mxu0 0.0
    %1047 = vmatpush1.xpose.msra.mxu0 0.0
    %1048 = vmatprep.subr.mxu0 0.0
    %1049 = vmatpush1.xpose.msra.mxu0 0.0
    %1050 = vmatprep.subr.mxu0 0.0
    %1051 = vmatpush1.xpose.msra.mxu0 0.0
    %1052 = vmatprep.subr.mxu0 0.0
    %1053 = vmatpush1.xpose.msra.mxu0 0.0
    %1054 = vmatprep.subr.mxu0 0.0
    %1055 = vmatpush1.xpose.msra.mxu0 0.0
    %1056 = vmatprep.subr.mxu0 0.0
    %1057 = vmatpush1.xpose.msra.mxu0 0.0
    %1058 = vmatprep.subr.mxu0 0.0
    %1059 = vmatpush1.xpose.msra.mxu0 0.0
    %1060 = vmatprep.subr.mxu0 0.0
    %1061 = vmatpush1.xpose.msra.mxu0 0.0
    %1062 = vmatprep.subr.mxu0 0.0
    %1063 = vmatpush1.xpose.msra.mxu0 0.0
    %1064 = vmatprep.subr.mxu0 0.0
    %1065 = vmatpush1.xpose.msra.mxu0 0.0
    %1066 = vmatprep.subr.mxu0 0.0
    %1067 = vmatpush1.xpose.msra.mxu0 0.0
    %1068 = vmatprep.subr.mxu0 0.0
    %1069 = vmatpush1.xpose.msra.mxu0 0.0
    %1070 = vmatprep.subr.mxu0 0.0
    %1071 = vmatpush1.xpose.msra.mxu0 0.0
    %1072 = vmatprep.subr.mxu0 0.0
    %1073 = vmatpush1.xpose.msra.mxu0 0.0
    %1074 = vmatprep.subr.mxu0 0.0
    %1075 = vmatpush1.xpose.msra.mxu0 0.0
    %1076 = vmatprep.subr.mxu0 0.0
    %1077 = vmatpush1.xpose.msra.mxu0 0.0
    %1078 = vmatprep.subr.mxu0 0.0
    %1079 = vmatpush1.xpose.msra.mxu0 0.0
    %1080 = vmatprep.subr.mxu0 0.0
    %1081 = vmatpush1.xpose.msra.mxu0 0.0
    %1082 = vmatprep.subr.mxu0 0.0
    %1083 = vmatpush1.xpose.msra.mxu0 0.0
    %1084 = vmatprep.mubr.f32.mxu0 0.0
    %1085 = vmatmul.mubr.f32.gmra.mrb[0].mxu0 %v1016
    %v1086 = vpop.f32.mrb[0].mxu0
    %v1087 = vadd.f32 %v297, %v1086
    %v1088 = vpop.f32.mrb[0].mxu0
    %1089 = vdwg.mxu0
    %v1090 = vsel %vm298, %v1087, -inf
    %1091 = vmax.xlane.f32.xlu0 %v1090
    %v1092 = vpop.xlane.xlu0 %1091
    %v1093 = vsub.f32 %v1087, %v1092
    %v1094 = vmul.f32 %v1093, 1.442695
    %v1095 = vpow.pop %v1094
    %v1096 = vsel %vm298, %v1095, 0.0
    %1097 = vadd.xlane.f32.xlu0 %v1096
    %v1098 = vpop.xlane.xlu0 %1097
    %v1099 = vrcp.pop %v1098
    %v1100 = vmul.f32 %v1095, %v1099
    %1101 = vrot.lane.b32.xlu0 %v279, 72
    %v1102 = vpop.permute.xlu0 %1101
    %v1105 = vsel %vm298, %v1100, 0
    %1107 = vmatprep.subr.mxu0 0.0
    %1108 = vmatpush1.msra.mxu0 %v1102
    %1109 = vmatprep.subr.mxu0 0.0
    %1110 = vmatpush1.msra.mxu0 0.0
    %1111 = vmatprep.subr.mxu0 0.0
    %1112 = vmatpush1.msra.mxu0 0.0
    %1113 = vmatprep.subr.mxu0 0.0
    %1114 = vmatpush1.msra.mxu0 0.0
    %1115 = vmatprep.subr.mxu0 0.0
    %1116 = vmatpush1.msra.mxu0 0.0
    %1117 = vmatprep.subr.mxu0 0.0
    %1118 = vmatpush1.msra.mxu0 0.0
    %1119 = vmatprep.subr.mxu0 0.0
    %1120 = vmatpush1.msra.mxu0 0.0
    %1121 = vmatprep.subr.mxu0 0.0
    %1122 = vmatpush1.msra.mxu0 0.0
    %1123 = vmatprep.subr.mxu0 0.0
    %1124 = vmatpush1.msra.mxu0 0.0
    %1125 = vmatprep.subr.mxu0 0.0
    %1126 = vmatpush1.msra.mxu0 0.0
    %1127 = vmatprep.subr.mxu0 0.0
    %1128 = vmatpush1.msra.mxu0 0.0
    %1129 = vmatprep.subr.mxu0 0.0
    %1130 = vmatpush1.msra.mxu0 0.0
    %1131 = vmatprep.subr.mxu0 0.0
    %1132 = vmatpush1.msra.mxu0 0.0
    %1133 = vmatprep.subr.mxu0 0.0
    %1134 = vmatpush1.msra.mxu0 0.0
    %1135 = vmatprep.subr.mxu0 0.0
    %1136 = vmatpush1.msra.mxu0 0.0
    %1137 = vmatprep.subr.mxu0 0.0
    %1138 = vmatpush1.msra.mxu0 0.0
    %1139 = vmatprep.subr.mxu0 0.0
    %1140 = vmatpush1.msra.mxu0 0.0
    %1141 = vmatprep.subr.mxu0 0.0
    %1142 = vmatpush1.msra.mxu0 0.0
    %1143 = vmatprep.subr.mxu0 0.0
    %1144 = vmatpush1.msra.mxu0 0.0
    %1145 = vmatprep.subr.mxu0 0.0
    %1146 = vmatpush1.msra.mxu0 0.0
    %1147 = vmatprep.subr.mxu0 0.0
    %1148 = vmatpush1.msra.mxu0 0.0
    %1149 = vmatprep.subr.mxu0 0.0
    %1150 = vmatpush1.msra.mxu0 0.0
    %1151 = vmatprep.subr.mxu0 0.0
    %1152 = vmatpush1.msra.mxu0 0.0
    %1153 = vmatprep.subr.mxu0 0.0
    %1154 = vmatpush1.msra.mxu0 0.0
    %1155 = vmatprep.subr.mxu0 0.0
    %1156 = vmatpush1.msra.mxu0 0.0
    %1157 = vmatprep.subr.mxu0 0.0
    %1158 = vmatpush1.msra.mxu0 0.0
    %1159 = vmatprep.subr.mxu0 0.0
    %1160 = vmatpush1.msra.mxu0 0.0
    %1161 = vmatprep.subr.mxu0 0.0
    %1162 = vmatpush1.msra.mxu0 0.0
    %1163 = vmatprep.subr.mxu0 0.0
    %1164 = vmatpush1.msra.mxu0 0.0
    %1165 = vmatprep.subr.mxu0 0.0
    %1166 = vmatpush1.msra.mxu0 0.0
    %1167 = vmatprep.subr.mxu0 0.0
    %1168 = vmatpush1.msra.mxu0 0.0
    %1169 = vmatprep.subr.mxu0 0.0
    %1170 = vmatpush1.msra.mxu0 0.0
    %1171 = vmatprep.mubr.f32.mxu0 0.0
    %1172 = vmatmul.mubr.f32.gmra.mrb[0].mxu0 %v1105
    %v1173 = vpop.f32.mrb[0].mxu0
    %v1174 = vadd.f32 0.0, %v1173
    %v1175 = vpop.f32.mrb[0].mxu0
    %1176 = vdwg.mxu0
    %v1178 = vsel %vm298, %v1174, 0
    %1180 = vmatprep.subr.mxu0 0.0
    %1181 = vmatpush1.msra.mxu0 %v290
    %1182 = vmatprep.subr.mxu0 0.0
    %1183 = vmatpush1.msra.mxu0 0.0
    %1184 = vmatprep.subr.mxu0 0.0
    %1185 = vmatpush1.msra.mxu0 0.0
    %1186 = vmatprep.subr.mxu0 0.0
    %1187 = vmatpush1.msra.mxu0 0.0
    %1188 = vmatprep.subr.mxu0 0.0
    %1189 = vmatpush1.msra.mxu0 0.0
    %1190 = vmatprep.subr.mxu0 0.0
    %1191 = vmatpush1.msra.mxu0 0.0
    %1192 = vmatprep.subr.mxu0 0.0
    %1193 = vmatpush1.msra.mxu0 0.0
    %1194 = vmatprep.subr.mxu0 0.0
    %1195 = vmatpush1.msra.mxu0 0.0
    %1196 = vmatprep.subr.mxu0 0.0
    %1197 = vmatpush1.msra.mxu0 0.0
    %1198 = vmatprep.subr.mxu0 0.0
    %1199 = vmatpush1.msra.mxu0 0.0
    %1200 = vmatprep.subr.mxu0 0.0
    %1201 = vmatpush1.msra.mxu0 0.0
    %1202 = vmatprep.subr.mxu0 0.0
    %1203 = vmatpush1.msra.mxu0 0.0
    %1204 = vmatprep.subr.mxu0 0.0
    %1205 = vmatpush1.msra.mxu0 0.0
    %1206 = vmatprep.subr.mxu0 0.0
    %1207 = vmatpush1.msra.mxu0 0.0
    %1208 = vmatprep.subr.mxu0 0.0
    %1209 = vmatpush1.msra.mxu0 0.0
    %1210 = vmatprep.subr.mxu0 0.0
    %1211 = vmatpush1.msra.mxu0 0.0
    %1212 = vmatprep.subr.mxu0 0.0
    %1213 = vmatpush1.msra.mxu0 0.0
    %1214 = vmatprep.subr.mxu0 0.0
    %1215 = vmatpush1.msra.mxu0 0.0
    %1216 = vmatprep.subr.mxu0 0.0
    %1217 = vmatpush1.msra.mxu0 0.0
    %1218 = vmatprep.subr.mxu0 0.0
    %1219 = vmatpush1.msra.mxu0 0.0
    %1220 = vmatprep.subr.mxu0 0.0
    %1221 = vmatpush1.msra.mxu0 0.0
    %1222 = vmatprep.subr.mxu0 0.0
    %1223 = vmatpush1.msra.mxu0 0.0
    %1224 = vmatprep.subr.mxu0 0.0
    %1225 = vmatpush1.msra.mxu0 0.0
    %1226 = vmatprep.subr.mxu0 0.0
    %1227 = vmatpush1.msra.mxu0 0.0
    %1228 = vmatprep.subr.mxu0 0.0
    %1229 = vmatpush1.msra.mxu0 0.0
    %1230 = vmatprep.subr.mxu0 0.0
    %1231 = vmatpush1.msra.mxu0 0.0
    %1232 = vmatprep.subr.mxu0 0.0
    %1233 = vmatpush1.msra.mxu0 0.0
    %1234 = vmatprep.subr.mxu0 0.0
    %1235 = vmatpush1.msra.mxu0 0.0
    %1236 = vmatprep.subr.mxu0 0.0
    %1237 = vmatpush1.msra.mxu0 0.0
    %1238 = vmatprep.subr.mxu0 0.0
    %1239 = vmatpush1.msra.mxu0 0.0
    %1240 = vmatprep.subr.mxu0 0.0
    %1241 = vmatpush1.msra.mxu0 0.0
    %1242 = vmatprep.subr.mxu0 0.0
    %1243 = vmatpush1.msra.mxu0 0.0
    %1244 = vmatprep.mubr.f32.mxu0 0.0
    %1245 = vmatmul.mubr.f32.gmra.mrb[0].mxu0 %v1178
    %v1246 = vpop.f32.mrb[0].mxu0
    %v1247 = vadd.f32 0.0, %v1246
    %v1248 = vpop.f32.mrb[0].mxu0
    %1249 = vdwg.mxu0
    %v1250 = vadd.f32 %v1011, %v1247
    %v1252 = vlaneseq
    %v1253 = vshrl.u32 %v1252, 7
    %v1254 = vsub.s32 0, %v1253
    %v1255 = vrot.slane %v291, %v1254
    %v1257 = vadd.f32 %v1250, %v1255
    %1258 = vst.msk [vmem:[#allocation11] sm:$0xff] %vm111, %v1257
    %v1260 = vsel %vm298, %v190, 0
    %v1263 = vsel %vm298, %v284, 0
    %1265 = vmatprep.subr.mxu0 0.0
    %1266 = vmatpush1.xpose.msra.mxu0 %v1263
    %1267 = vmatprep.subr.mxu0 0.0
    %1268 = vmatpush1.xpose.msra.mxu0 0.0
    %1269 = vmatprep.subr.mxu0 0.0
    %1270 = vmatpush1.xpose.msra.mxu0 0.0
    %1271 = vmatprep.subr.mxu0 0.0
    %1272 = vmatpush1.xpose.msra.mxu0 0.0
    %1273 = vmatprep.subr.mxu0 0.0
    %1274 = vmatpush1.xpose.msra.mxu0 0.0
    %1275 = vmatprep.subr.mxu0 0.0
    %1276 = vmatpush1.xpose.msra.mxu0 0.0
    %1277 = vmatprep.subr.mxu0 0.0
    %1278 = vmatpush1.xpose.msra.mxu0 0.0
    %1279 = vmatprep.subr.mxu0 0.0
    %1280 = vmatpush1.xpose.msra.mxu0 0.0
    %1281 = vmatprep.subr.mxu0 0.0
    %1282 = vmatpush1.xpose.msra.mxu0 0.0
    %1283 = vmatprep.subr.mxu0 0.0
    %1284 = vmatpush1.xpose.msra.mxu0 0.0
    %1285 = vmatprep.subr.mxu0 0.0
    %1286 = vmatpush1.xpose.msra.mxu0 0.0
    %1287 = vmatprep.subr.mxu0 0.0
    %1288 = vmatpush1.xpose.msra.mxu0 0.0
    %1289 = vmatprep.subr.mxu0 0.0
    %1290 = vmatpush1.xpose.msra.mxu0 0.0
    %1291 = vmatprep.subr.mxu0 0.0
    %1292 = vmatpush1.xpose.msra.mxu0 0.0
    %1293 = vmatprep.subr.mxu0 0.0
    %1294 = vmatpush1.xpose.msra.mxu0 0.0
    %1295 = vmatprep.subr.mxu0 0.0
    %1296 = vmatpush1.xpose.msra.mxu0 0.0
    %1297 = vmatprep.subr.mxu0 0.0
    %1298 = vmatpush1.xpose.msra.mxu0 0.0
    %1299 = vmatprep.subr.mxu0 0.0
    %1300 = vmatpush1.xpose.msra.mxu0 0.0
    %1301 = vmatprep.subr.mxu0 0.0
    %1302 = vmatpush1.xpose.msra.mxu0 0.0
    %1303 = vmatprep.subr.mxu0 0.0
    %1304 = vmatpush1.xpose.msra.mxu0 0.0
    %1305 = vmatprep.subr.mxu0 0.0
    %1306 = vmatpush1.xpose.msra.mxu0 0.0
    %1307 = vmatprep.subr.mxu0 0.0
    %1308 = vmatpush1.xpose.msra.mxu0 0.0
    %1309 = vmatprep.subr.mxu0 0.0
    %1310 = vmatpush1.xpose.msra.mxu0 0.0
    %1311 = vmatprep.subr.mxu0 0.0
    %1312 = vmatpush1.xpose.msra.mxu0 0.0
    %1313 = vmatprep.subr.mxu0 0.0
    %1314 = vmatpush1.xpose.msra.mxu0 0.0
    %1315 = vmatprep.subr.mxu0 0.0
    %1316 = vmatpush1.xpose.msra.mxu0 0.0
    %1317 = vmatprep.subr.mxu0 0.0
    %1318 = vmatpush1.xpose.msra.mxu0 0.0
    %1319 = vmatprep.subr.mxu0 0.0
    %1320 = vmatpush1.xpose.msra.mxu0 0.0
    %1321 = vmatprep.subr.mxu0 0.0
    %1322 = vmatpush1.xpose.msra.mxu0 0.0
    %1323 = vmatprep.subr.mxu0 0.0
    %1324 = vmatpush1.xpose.msra.mxu0 0.0
    %1325 = vmatprep.subr.mxu0 0.0
    %1326 = vmatpush1.xpose.msra.mxu0 0.0
    %1327 = vmatprep.subr.mxu0 0.0
    %1328 = vmatpush1.xpose.msra.mxu0 0.0
    %1329 = vmatprep.mubr.f32.mxu0 0.0
    %1330 = vmatmul.mubr.f32.gmra.mrb[0].mxu0 %v1260
    %v1331 = vpop.f32.mrb[0].mxu0
    %v1332 = vadd.f32 %v297, %v1331
    %v1333 = vpop.f32.mrb[0].mxu0
    %1334 = vdwg.mxu0
    %v1335 = vsel %vm298, %v1332, -inf
    %1336 = vmax.xlane.f32.xlu0 %v1335
    %v1337 = vpop.xlane.xlu0 %1336
    %v1338 = vsub.f32 %v1332, %v1337
    %v1339 = vmul.f32 %v1338, 1.442695
    %v1340 = vpow.pop %v1339
    %v1341 = vsel %vm298, %v1340, 0.0
    %1342 = vadd.xlane.f32.xlu0 %v1341
    %v1343 = vpop.xlane.xlu0 %1342
    %v1344 = vrcp.pop %v1343
    %v1345 = vmul.f32 %v1340, %v1344
    %1346 = vrot.lane.b32.xlu0 %v284, 96
    %v1347 = vpop.permute.xlu0 %1346
    %v1350 = vsel %vm298, %v1345, 0
    %1352 = vmatprep.subr.mxu0 0.0
    %1353 = vmatpush1.msra.mxu0 %v1347
    %1354 = vmatprep.subr.mxu0 0.0
    %1355 = vmatpush1.msra.mxu0 0.0
    %1356 = vmatprep.subr.mxu0 0.0
    %1357 = vmatpush1.msra.mxu0 0.0
    %1358 = vmatprep.subr.mxu0 0.0
    %1359 = vmatpush1.msra.mxu0 0.0
    %1360 = vmatprep.subr.mxu0 0.0
    %1361 = vmatpush1.msra.mxu0 0.0
    %1362 = vmatprep.subr.mxu0 0.0
    %1363 = vmatpush1.msra.mxu0 0.0
    %1364 = vmatprep.subr.mxu0 0.0
    %1365 = vmatpush1.msra.mxu0 0.0
    %1366 = vmatprep.subr.mxu0 0.0
    %1367 = vmatpush1.msra.mxu0 0.0
    %1368 = vmatprep.subr.mxu0 0.0
    %1369 = vmatpush1.msra.mxu0 0.0
    %1370 = vmatprep.subr.mxu0 0.0
    %1371 = vmatpush1.msra.mxu0 0.0
    %1372 = vmatprep.subr.mxu0 0.0
    %1373 = vmatpush1.msra.mxu0 0.0
    %1374 = vmatprep.subr.mxu0 0.0
    %1375 = vmatpush1.msra.mxu0 0.0
    %1376 = vmatprep.subr.mxu0 0.0
    %1377 = vmatpush1.msra.mxu0 0.0
    %1378 = vmatprep.subr.mxu0 0.0
    %1379 = vmatpush1.msra.mxu0 0.0
    %1380 = vmatprep.subr.mxu0 0.0
    %1381 = vmatpush1.msra.mxu0 0.0
    %1382 = vmatprep.subr.mxu0 0.0
    %1383 = vmatpush1.msra.mxu0 0.0
    %1384 = vmatprep.subr.mxu0 0.0
    %1385 = vmatpush1.msra.mxu0 0.0
    %1386 = vmatprep.subr.mxu0 0.0
    %1387 = vmatpush1.msra.mxu0 0.0
    %1388 = vmatprep.subr.mxu0 0.0
    %1389 = vmatpush1.msra.mxu0 0.0
    %1390 = vmatprep.subr.mxu0 0.0
    %1391 = vmatpush1.msra.mxu0 0.0
    %1392 = vmatprep.subr.mxu0 0.0
    %1393 = vmatpush1.msra.mxu0 0.0
    %1394 = vmatprep.subr.mxu0 0.0
    %1395 = vmatpush1.msra.mxu0 0.0
    %1396 = vmatprep.subr.mxu0 0.0
    %1397 = vmatpush1.msra.mxu0 0.0
    %1398 = vmatprep.subr.mxu0 0.0
    %1399 = vmatpush1.msra.mxu0 0.0
    %1400 = vmatprep.subr.mxu0 0.0
    %1401 = vmatpush1.msra.mxu0 0.0
    %1402 = vmatprep.subr.mxu0 0.0
    %1403 = vmatpush1.msra.mxu0 0.0
    %1404 = vmatprep.subr.mxu0 0.0
    %1405 = vmatpush1.msra.mxu0 0.0
    %1406 = vmatprep.subr.mxu0 0.0
    %1407 = vmatpush1.msra.mxu0 0.0
    %1408 = vmatprep.subr.mxu0 0.0
    %1409 = vmatpush1.msra.mxu0 0.0
    %1410 = vmatprep.subr.mxu0 0.0
    %1411 = vmatpush1.msra.mxu0 0.0
    %1412 = vmatprep.subr.mxu0 0.0
    %1413 = vmatpush1.msra.mxu0 0.0
    %1414 = vmatprep.subr.mxu0 0.0
    %1415 = vmatpush1.msra.mxu0 0.0
    %1416 = vmatprep.mubr.f32.mxu0 0.0
    %1417 = vmatmul.mubr.f32.gmra.mrb[0].mxu0 %v1350
    %v1418 = vpop.f32.mrb[0].mxu0
    %v1419 = vadd.f32 0.0, %v1418
    %v1420 = vpop.f32.mrb[0].mxu0
    %1421 = vdwg.mxu0
    %1422 = vrot.lane.b32.xlu0 %v190, 120
    %v1423 = vpop.permute.xlu0 %1422
    %1424 = vrot.lane.b32.xlu0 %v284, 120
    %v1425 = vpop.permute.xlu0 %1424
    %v1426 = vsel %vm298, %v1423, 0
    %v1428 = vsel %vm298, %v1425, 0
    %1430 = vmatprep.subr.mxu0 0.0
    %1431 = vmatpush1.xpose.msra.mxu0 %v1428
    %1432 = vmatprep.subr.mxu0 0.0
    %1433 = vmatpush1.xpose.msra.mxu0 0.0
    %1434 = vmatprep.subr.mxu0 0.0
    %1435 = vmatpush1.xpose.msra.mxu0 0.0
    %1436 = vmatprep.subr.mxu0 0.0
    %1437 = vmatpush1.xpose.msra.mxu0 0.0
    %1438 = vmatprep.subr.mxu0 0.0
    %1439 = vmatpush1.xpose.msra.mxu0 0.0
    %1440 = vmatprep.subr.mxu0 0.0
    %1441 = vmatpush1.xpose.msra.mxu0 0.0
    %1442 = vmatprep.subr.mxu0 0.0
    %1443 = vmatpush1.xpose.msra.mxu0 0.0
    %1444 = vmatprep.subr.mxu0 0.0
    %1445 = vmatpush1.xpose.msra.mxu0 0.0
    %1446 = vmatprep.subr.mxu0 0.0
    %1447 = vmatpush1.xpose.msra.mxu0 0.0
    %1448 = vmatprep.subr.mxu0 0.0
    %1449 = vmatpush1.xpose.msra.mxu0 0.0
    %1450 = vmatprep.subr.mxu0 0.0
    %1451 = vmatpush1.xpose.msra.mxu0 0.0
    %1452 = vmatprep.subr.mxu0 0.0
    %1453 = vmatpush1.xpose.msra.mxu0 0.0
    %1454 = vmatprep.subr.mxu0 0.0
    %1455 = vmatpush1.xpose.msra.mxu0 0.0
    %1456 = vmatprep.subr.mxu0 0.0
    %1457 = vmatpush1.xpose.msra.mxu0 0.0
    %1458 = vmatprep.subr.mxu0 0.0
    %1459 = vmatpush1.xpose.msra.mxu0 0.0
    %1460 = vmatprep.subr.mxu0 0.0
    %1461 = vmatpush1.xpose.msra.mxu0 0.0
    %1462 = vmatprep.subr.mxu0 0.0
    %1463 = vmatpush1.xpose.msra.mxu0 0.0
    %1464 = vmatprep.subr.mxu0 0.0
    %1465 = vmatpush1.xpose.msra.mxu0 0.0
    %1466 = vmatprep.subr.mxu0 0.0
    %1467 = vmatpush1.xpose.msra.mxu0 0.0
    %1468 = vmatprep.subr.mxu0 0.0
    %1469 = vmatpush1.xpose.msra.mxu0 0.0
    %1470 = vmatprep.subr.mxu0 0.0
    %1471 = vmatpush1.xpose.msra.mxu0 0.0
    %1472 = vmatprep.subr.mxu0 0.0
    %1473 = vmatpush1.xpose.msra.mxu0 0.0
    %1474 = vmatprep.subr.mxu0 0.0
    %1475 = vmatpush1.xpose.msra.mxu0 0.0
    %1476 = vmatprep.subr.mxu0 0.0
    %1477 = vmatpush1.xpose.msra.mxu0 0.0
    %1478 = vmatprep.subr.mxu0 0.0
    %1479 = vmatpush1.xpose.msra.mxu0 0.0
    %1480 = vmatprep.subr.mxu0 0.0
    %1481 = vmatpush1.xpose.msra.mxu0 0.0
    %1482 = vmatprep.subr.mxu0 0.0
    %1483 = vmatpush1.xpose.msra.mxu0 0.0
    %1484 = vmatprep.subr.mxu0 0.0
    %1485 = vmatpush1.xpose.msra.mxu0 0.0
    %1486 = vmatprep.subr.mxu0 0.0
    %1487 = vmatpush1.xpose.msra.mxu0 0.0
    %1488 = vmatprep.subr.mxu0 0.0
    %1489 = vmatpush1.xpose.msra.mxu0 0.0
    %1490 = vmatprep.subr.mxu0 0.0
    %1491 = vmatpush1.xpose.msra.mxu0 0.0
    %1492 = vmatprep.subr.mxu0 0.0
    %1493 = vmatpush1.xpose.msra.mxu0 0.0
    %1494 = vmatprep.mubr.f32.mxu0 0.0
    %1495 = vmatmul.mubr.f32.gmra.mrb[0].mxu0 %v1426
    %v1496 = vpop.f32.mrb[0].mxu0
    %v1497 = vadd.f32 %v297, %v1496
    %v1498 = vpop.f32.mrb[0].mxu0
    %1499 = vdwg.mxu0
    %v1500 = vsel %vm298, %v1497, -inf
    %1501 = vmax.xlane.f32.xlu0 %v1500
    %v1502 = vpop.xlane.xlu0 %1501
    %v1503 = vsub.f32 %v1497, %v1502
    %v1504 = vmul.f32 %v1503, 1.442695
    %v1505 = vpow.pop %v1504
    %v1506 = vsel %vm298, %v1505, 0.0
    %1507 = vadd.xlane.f32.xlu0 %v1506
    %v1508 = vpop.xlane.xlu0 %1507
    %v1509 = vrcp.pop %v1508
    %v1510 = vmul.f32 %v1505, %v1509
    %1511 = vrot.lane.b32.xlu0 %v284, 88
    %v1512 = vpop.permute.xlu0 %1511
    %v1515 = vsel %vm298, %v1510, 0
    %1517 = vmatprep.subr.mxu0 0.0
    %1518 = vmatpush1.msra.mxu0 %v1512
    %1519 = vmatprep.subr.mxu0 0.0
    %1520 = vmatpush1.msra.mxu0 0.0
    %1521 = vmatprep.subr.mxu0 0.0
    %1522 = vmatpush1.msra.mxu0 0.0
    %1523 = vmatprep.subr.mxu0 0.0
    %1524 = vmatpush1.msra.mxu0 0.0
    %1525 = vmatprep.subr.mxu0 0.0
    %1526 = vmatpush1.msra.mxu0 0.0
    %1527 = vmatprep.subr.mxu0 0.0
    %1528 = vmatpush1.msra.mxu0 0.0
    %1529 = vmatprep.subr.mxu0 0.0
    %1530 = vmatpush1.msra.mxu0 0.0
    %1531 = vmatprep.subr.mxu0 0.0
    %1532 = vmatpush1.msra.mxu0 0.0
    %1533 = vmatprep.subr.mxu0 0.0
    %1534 = vmatpush1.msra.mxu0 0.0
    %1535 = vmatprep.subr.mxu0 0.0
    %1536 = vmatpush1.msra.mxu0 0.0
    %1537 = vmatprep.subr.mxu0 0.0
    %1538 = vmatpush1.msra.mxu0 0.0
    %1539 = vmatprep.subr.mxu0 0.0
    %1540 = vmatpush1.msra.mxu0 0.0
    %1541 = vmatprep.subr.mxu0 0.0
    %1542 = vmatpush1.msra.mxu0 0.0
    %1543 = vmatprep.subr.mxu0 0.0
    %1544 = vmatpush1.msra.mxu0 0.0
    %1545 = vmatprep.subr.mxu0 0.0
    %1546 = vmatpush1.msra.mxu0 0.0
    %1547 = vmatprep.subr.mxu0 0.0
    %1548 = vmatpush1.msra.mxu0 0.0
    %1549 = vmatprep.subr.mxu0 0.0
    %1550 = vmatpush1.msra.mxu0 0.0
    %1551 = vmatprep.subr.mxu0 0.0
    %1552 = vmatpush1.msra.mxu0 0.0
    %1553 = vmatprep.subr.mxu0 0.0
    %1554 = vmatpush1.msra.mxu0 0.0
    %1555 = vmatprep.subr.mxu0 0.0
    %1556 = vmatpush1.msra.mxu0 0.0
    %1557 = vmatprep.subr.mxu0 0.0
    %1558 = vmatpush1.msra.mxu0 0.0
    %1559 = vmatprep.subr.mxu0 0.0
    %1560 = vmatpush1.msra.mxu0 0.0
    %1561 = vmatprep.subr.mxu0 0.0
    %1562 = vmatpush1.msra.mxu0 0.0
    %1563 = vmatprep.subr.mxu0 0.0
    %1564 = vmatpush1.msra.mxu0 0.0
    %1565 = vmatprep.subr.mxu0 0.0
    %1566 = vmatpush1.msra.mxu0 0.0
    %1567 = vmatprep.subr.mxu0 0.0
    %1568 = vmatpush1.msra.mxu0 0.0
    %1569 = vmatprep.subr.mxu0 0.0
    %1570 = vmatpush1.msra.mxu0 0.0
    %1571 = vmatprep.subr.mxu0 0.0
    %1572 = vmatpush1.msra.mxu0 0.0
    %1573 = vmatprep.subr.mxu0 0.0
    %1574 = vmatpush1.msra.mxu0 0.0
    %1575 = vmatprep.subr.mxu0 0.0
    %1576 = vmatpush1.msra.mxu0 0.0
    %1577 = vmatprep.subr.mxu0 0.0
    %1578 = vmatpush1.msra.mxu0 0.0
    %1579 = vmatprep.subr.mxu0 0.0
    %1580 = vmatpush1.msra.mxu0 0.0
    %1581 = vmatprep.mubr.f32.mxu0 0.0
    %1582 = vmatmul.mubr.f32.gmra.mrb[0].mxu0 %v1515
    %v1583 = vpop.f32.mrb[0].mxu0
    %v1584 = vadd.f32 0.0, %v1583
    %v1585 = vpop.f32.mrb[0].mxu0
    %1586 = vdwg.mxu0
    %v1588 = vsel %vm298, %v1584, 0
    %1590 = vmatprep.subr.mxu0 0.0
    %1591 = vmatpush1.msra.mxu0 %v288
    %1592 = vmatprep.subr.mxu0 0.0
    %1593 = vmatpush1.msra.mxu0 0.0
    %1594 = vmatprep.subr.mxu0 0.0
    %1595 = vmatpush1.msra.mxu0 0.0
    %1596 = vmatprep.subr.mxu0 0.0
    %1597 = vmatpush1.msra.mxu0 0.0
    %1598 = vmatprep.subr.mxu0 0.0
    %1599 = vmatpush1.msra.mxu0 0.0
    %1600 = vmatprep.subr.mxu0 0.0
    %1601 = vmatpush1.msra.mxu0 0.0
    %1602 = vmatprep.subr.mxu0 0.0
    %1603 = vmatpush1.msra.mxu0 0.0
    %1604 = vmatprep.subr.mxu0 0.0
    %1605 = vmatpush1.msra.mxu0 0.0
    %1606 = vmatprep.subr.mxu0 0.0
    %1607 = vmatpush1.msra.mxu0 0.0
    %1608 = vmatprep.subr.mxu0 0.0
    %1609 = vmatpush1.msra.mxu0 0.0
    %1610 = vmatprep.subr.mxu0 0.0
    %1611 = vmatpush1.msra.mxu0 0.0
    %1612 = vmatprep.subr.mxu0 0.0
    %1613 = vmatpush1.msra.mxu0 0.0
    %1614 = vmatprep.subr.mxu0 0.0
    %1615 = vmatpush1.msra.mxu0 0.0
    %1616 = vmatprep.subr.mxu0 0.0
    %1617 = vmatpush1.msra.mxu0 0.0
    %1618 = vmatprep.subr.mxu0 0.0
    %1619 = vmatpush1.msra.mxu0 0.0
    %1620 = vmatprep.subr.mxu0 0.0
    %1621 = vmatpush1.msra.mxu0 0.0
    %1622 = vmatprep.subr.mxu0 0.0
    %1623 = vmatpush1.msra.mxu0 0.0
    %1624 = vmatprep.subr.mxu0 0.0
    %1625 = vmatpush1.msra.mxu0 0.0
    %1626 = vmatprep.subr.mxu0 0.0
    %1627 = vmatpush1.msra.mxu0 0.0
    %1628 = vmatprep.subr.mxu0 0.0
    %1629 = vmatpush1.msra.mxu0 0.0
    %1630 = vmatprep.subr.mxu0 0.0
    %1631 = vmatpush1.msra.mxu0 0.0
    %1632 = vmatprep.subr.mxu0 0.0
    %1633 = vmatpush1.msra.mxu0 0.0
    %1634 = vmatprep.subr.mxu0 0.0
    %1635 = vmatpush1.msra.mxu0 0.0
    %1636 = vmatprep.subr.mxu0 0.0
    %1637 = vmatpush1.msra.mxu0 0.0
    %1638 = vmatprep.subr.mxu0 0.0
    %1639 = vmatpush1.msra.mxu0 0.0
    %1640 = vmatprep.subr.mxu0 0.0
    %1641 = vmatpush1.msra.mxu0 0.0
    %1642 = vmatprep.subr.mxu0 0.0
    %1643 = vmatpush1.msra.mxu0 0.0
    %1644 = vmatprep.subr.mxu0 0.0
    %1645 = vmatpush1.msra.mxu0 0.0
    %1646 = vmatprep.subr.mxu0 0.0
    %1647 = vmatpush1.msra.mxu0 0.0
    %1648 = vmatprep.subr.mxu0 0.0
    %1649 = vmatpush1.msra.mxu0 0.0
    %1650 = vmatprep.subr.mxu0 0.0
    %1651 = vmatpush1.msra.mxu0 0.0
    %1652 = vmatprep.subr.mxu0 0.0
    %1653 = vmatpush1.msra.mxu0 0.0
    %1654 = vmatprep.mubr.f32.mxu0 0.0
    %1655 = vmatmul.mubr.f32.gmra.mrb[0].mxu0 %v1588
    %v1656 = vpop.f32.mrb[0].mxu0
    %v1657 = vadd.f32 0.0, %v1656
    %v1658 = vpop.f32.mrb[0].mxu0
    %1659 = vdwg.mxu0
    %v1661 = vsel %vm298, %v1419, 0
    %1663 = vmatprep.subr.mxu0 0.0
    %1664 = vmatpush1.msra.mxu0 %v287
    %1665 = vmatprep.subr.mxu0 0.0
    %1666 = vmatpush1.msra.mxu0 0.0
    %1667 = vmatprep.subr.mxu0 0.0
    %1668 = vmatpush1.msra.mxu0 0.0
    %1669 = vmatprep.subr.mxu0 0.0
    %1670 = vmatpush1.msra.mxu0 0.0
    %1671 = vmatprep.subr.mxu0 0.0
    %1672 = vmatpush1.msra.mxu0 0.0
    %1673 = vmatprep.subr.mxu0 0.0
    %1674 = vmatpush1.msra.mxu0 0.0
    %1675 = vmatprep.subr.mxu0 0.0
    %1676 = vmatpush1.msra.mxu0 0.0
    %1677 = vmatprep.subr.mxu0 0.0
    %1678 = vmatpush1.msra.mxu0 0.0
    %1679 = vmatprep.subr.mxu0 0.0
    %1680 = vmatpush1.msra.mxu0 0.0
    %1681 = vmatprep.subr.mxu0 0.0
    %1682 = vmatpush1.msra.mxu0 0.0
    %1683 = vmatprep.subr.mxu0 0.0
    %1684 = vmatpush1.msra.mxu0 0.0
    %1685 = vmatprep.subr.mxu0 0.0
    %1686 = vmatpush1.msra.mxu0 0.0
    %1687 = vmatprep.subr.mxu0 0.0
    %1688 = vmatpush1.msra.mxu0 0.0
    %1689 = vmatprep.subr.mxu0 0.0
    %1690 = vmatpush1.msra.mxu0 0.0
    %1691 = vmatprep.subr.mxu0 0.0
    %1692 = vmatpush1.msra.mxu0 0.0
    %1693 = vmatprep.subr.mxu0 0.0
    %1694 = vmatpush1.msra.mxu0 0.0
    %1695 = vmatprep.subr.mxu0 0.0
    %1696 = vmatpush1.msra.mxu0 0.0
    %1697 = vmatprep.subr.mxu0 0.0
    %1698 = vmatpush1.msra.mxu0 0.0
    %1699 = vmatprep.subr.mxu0 0.0
    %1700 = vmatpush1.msra.mxu0 0.0
    %1701 = vmatprep.subr.mxu0 0.0
    %1702 = vmatpush1.msra.mxu0 0.0
    %1703 = vmatprep.subr.mxu0 0.0
    %1704 = vmatpush1.msra.mxu0 0.0
    %1705 = vmatprep.subr.mxu0 0.0
    %1706 = vmatpush1.msra.mxu0 0.0
    %1707 = vmatprep.subr.mxu0 0.0
    %1708 = vmatpush1.msra.mxu0 0.0
    %1709 = vmatprep.subr.mxu0 0.0
    %1710 = vmatpush1.msra.mxu0 0.0
    %1711 = vmatprep.subr.mxu0 0.0
    %1712 = vmatpush1.msra.mxu0 0.0
    %1713 = vmatprep.subr.mxu0 0.0
    %1714 = vmatpush1.msra.mxu0 0.0
    %1715 = vmatprep.subr.mxu0 0.0
    %1716 = vmatpush1.msra.mxu0 0.0
    %1717 = vmatprep.subr.mxu0 0.0
    %1718 = vmatpush1.msra.mxu0 0.0
    %1719 = vmatprep.subr.mxu0 0.0
    %1720 = vmatpush1.msra.mxu0 0.0
    %1721 = vmatprep.subr.mxu0 0.0
    %1722 = vmatpush1.msra.mxu0 0.0
    %1723 = vmatprep.subr.mxu0 0.0
    %1724 = vmatpush1.msra.mxu0 0.0
    %1725 = vmatprep.subr.mxu0 0.0
    %1726 = vmatpush1.msra.mxu0 0.0
    %1727 = vmatprep.mubr.f32.mxu0 0.0
    %1728 = vmatmul.mubr.f32.gmra.mrb[0].mxu0 %v1661
    %v1729 = vpop.f32.mrb[0].mxu0
    %v1730 = vadd.f32 %v1657, %v1729
    %v1731 = vpop.f32.mrb[0].mxu0
    %1732 = vdwg.mxu0
    %1733 = vrot.lane.b32.xlu0 %v190, 112
    %v1734 = vpop.permute.xlu0 %1733
    %1735 = vrot.lane.b32.xlu0 %v284, 112
    %v1736 = vpop.permute.xlu0 %1735
    %v1737 = vsel %vm298, %v1734, 0
    %v1739 = vsel %vm298, %v1736, 0
    %1741 = vmatprep.subr.mxu0 0.0
    %1742 = vmatpush1.xpose.msra.mxu0 %v1739
    %1743 = vmatprep.subr.mxu0 0.0
    %1744 = vmatpush1.xpose.msra.mxu0 0.0
    %1745 = vmatprep.subr.mxu0 0.0
    %1746 = vmatpush1.xpose.msra.mxu0 0.0
    %1747 = vmatprep.subr.mxu0 0.0
    %1748 = vmatpush1.xpose.msra.mxu0 0.0
    %1749 = vmatprep.subr.mxu0 0.0
    %1750 = vmatpush1.xpose.msra.mxu0 0.0
    %1751 = vmatprep.subr.mxu0 0.0
    %1752 = vmatpush1.xpose.msra.mxu0 0.0
    %1753 = vmatprep.subr.mxu0 0.0
    %1754 = vmatpush1.xpose.msra.mxu0 0.0
    %1755 = vmatprep.subr.mxu0 0.0
    %1756 = vmatpush1.xpose.msra.mxu0 0.0
    %1757 = vmatprep.subr.mxu0 0.0
    %1758 = vmatpush1.xpose.msra.mxu0 0.0
    %1759 = vmatprep.subr.mxu0 0.0
    %1760 = vmatpush1.xpose.msra.mxu0 0.0
    %1761 = vmatprep.subr.mxu0 0.0
    %1762 = vmatpush1.xpose.msra.mxu0 0.0
    %1763 = vmatprep.subr.mxu0 0.0
    %1764 = vmatpush1.xpose.msra.mxu0 0.0
    %1765 = vmatprep.subr.mxu0 0.0
    %1766 = vmatpush1.xpose.msra.mxu0 0.0
    %1767 = vmatprep.subr.mxu0 0.0
    %1768 = vmatpush1.xpose.msra.mxu0 0.0
    %1769 = vmatprep.subr.mxu0 0.0
    %1770 = vmatpush1.xpose.msra.mxu0 0.0
    %1771 = vmatprep.subr.mxu0 0.0
    %1772 = vmatpush1.xpose.msra.mxu0 0.0
    %1773 = vmatprep.subr.mxu0 0.0
    %1774 = vmatpush1.xpose.msra.mxu0 0.0
    %1775 = vmatprep.subr.mxu0 0.0
    %1776 = vmatpush1.xpose.msra.mxu0 0.0
    %1777 = vmatprep.subr.mxu0 0.0
    %1778 = vmatpush1.xpose.msra.mxu0 0.0
    %1779 = vmatprep.subr.mxu0 0.0
    %1780 = vmatpush1.xpose.msra.mxu0 0.0
    %1781 = vmatprep.subr.mxu0 0.0
    %1782 = vmatpush1.xpose.msra.mxu0 0.0
    %1783 = vmatprep.subr.mxu0 0.0
    %1784 = vmatpush1.xpose.msra.mxu0 0.0
    %1785 = vmatprep.subr.mxu0 0.0
    %1786 = vmatpush1.xpose.msra.mxu0 0.0
    %1787 = vmatprep.subr.mxu0 0.0
    %1788 = vmatpush1.xpose.msra.mxu0 0.0
    %1789 = vmatprep.subr.mxu0 0.0
    %1790 = vmatpush1.xpose.msra.mxu0 0.0
    %1791 = vmatprep.subr.mxu0 0.0
    %1792 = vmatpush1.xpose.msra.mxu0 0.0
    %1793 = vmatprep.subr.mxu0 0.0
    %1794 = vmatpush1.xpose.msra.mxu0 0.0
    %1795 = vmatprep.subr.mxu0 0.0
    %1796 = vmatpush1.xpose.msra.mxu0 0.0
    %1797 = vmatprep.subr.mxu0 0.0
    %1798 = vmatpush1.xpose.msra.mxu0 0.0
    %1799 = vmatprep.subr.mxu0 0.0
    %1800 = vmatpush1.xpose.msra.mxu0 0.0
    %1801 = vmatprep.subr.mxu0 0.0
    %1802 = vmatpush1.xpose.msra.mxu0 0.0
    %1803 = vmatprep.subr.mxu0 0.0
    %1804 = vmatpush1.xpose.msra.mxu0 0.0
    %1805 = vmatprep.mubr.f32.mxu0 0.0
    %1806 = vmatmul.mubr.f32.gmra.mrb[0].mxu0 %v1737
    %v1807 = vpop.f32.mrb[0].mxu0
    %v1808 = vadd.f32 %v297, %v1807
    %v1809 = vpop.f32.mrb[0].mxu0
    %1810 = vdwg.mxu0
    %v1811 = vsel %vm298, %v1808, -inf
    %1812 = vmax.xlane.f32.xlu0 %v1811
    %v1813 = vpop.xlane.xlu0 %1812
    %v1814 = vsub.f32 %v1808, %v1813
    %v1815 = vmul.f32 %v1814, 1.442695
    %v1816 = vpow.pop %v1815
    %v1817 = vsel %vm298, %v1816, 0.0
    %1818 = vadd.xlane.f32.xlu0 %v1817
    %v1819 = vpop.xlane.xlu0 %1818
    %v1820 = vrcp.pop %v1819
    %v1821 = vmul.f32 %v1816, %v1820
    %1822 = vrot.lane.b32.xlu0 %v284, 80
    %v1823 = vpop.permute.xlu0 %1822
    %v1826 = vsel %vm298, %v1821, 0
    %1828 = vmatprep.subr.mxu0 0.0
    %1829 = vmatpush1.msra.mxu0 %v1823
    %1830 = vmatprep.subr.mxu0 0.0
    %1831 = vmatpush1.msra.mxu0 0.0
    %1832 = vmatprep.subr.mxu0 0.0
    %1833 = vmatpush1.msra.mxu0 0.0
    %1834 = vmatprep.subr.mxu0 0.0
    %1835 = vmatpush1.msra.mxu0 0.0
    %1836 = vmatprep.subr.mxu0 0.0
    %1837 = vmatpush1.msra.mxu0 0.0
    %1838 = vmatprep.subr.mxu0 0.0
    %1839 = vmatpush1.msra.mxu0 0.0
    %1840 = vmatprep.subr.mxu0 0.0
    %1841 = vmatpush1.msra.mxu0 0.0
    %1842 = vmatprep.subr.mxu0 0.0
    %1843 = vmatpush1.msra.mxu0 0.0
    %1844 = vmatprep.subr.mxu0 0.0
    %1845 = vmatpush1.msra.mxu0 0.0
    %1846 = vmatprep.subr.mxu0 0.0
    %1847 = vmatpush1.msra.mxu0 0.0
    %1848 = vmatprep.subr.mxu0 0.0
    %1849 = vmatpush1.msra.mxu0 0.0
    %1850 = vmatprep.subr.mxu0 0.0
    %1851 = vmatpush1.msra.mxu0 0.0
    %1852 = vmatprep.subr.mxu0 0.0
    %1853 = vmatpush1.msra.mxu0 0.0
    %1854 = vmatprep.subr.mxu0 0.0
    %1855 = vmatpush1.msra.mxu0 0.0
    %1856 = vmatprep.subr.mxu0 0.0
    %1857 = vmatpush1.msra.mxu0 0.0
    %1858 = vmatprep.subr.mxu0 0.0
    %1859 = vmatpush1.msra.mxu0 0.0
    %1860 = vmatprep.subr.mxu0 0.0
    %1861 = vmatpush1.msra.mxu0 0.0
    %1862 = vmatprep.subr.mxu0 0.0
    %1863 = vmatpush1.msra.mxu0 0.0
    %1864 = vmatprep.subr.mxu0 0.0
    %1865 = vmatpush1.msra.mxu0 0.0
    %1866 = vmatprep.subr.mxu0 0.0
    %1867 = vmatpush1.msra.mxu0 0.0
    %1868 = vmatprep.subr.mxu0 0.0
    %1869 = vmatpush1.msra.mxu0 0.0
    %1870 = vmatprep.subr.mxu0 0.0
    %1871 = vmatpush1.msra.mxu0 0.0
    %1872 = vmatprep.subr.mxu0 0.0
    %1873 = vmatpush1.msra.mxu0 0.0
    %1874 = vmatprep.subr.mxu0 0.0
    %1875 = vmatpush1.msra.mxu0 0.0
    %1876 = vmatprep.subr.mxu0 0.0
    %1877 = vmatpush1.msra.mxu0 0.0
    %1878 = vmatprep.subr.mxu0 0.0
    %1879 = vmatpush1.msra.mxu0 0.0
    %1880 = vmatprep.subr.mxu0 0.0
    %1881 = vmatpush1.msra.mxu0 0.0
    %1882 = vmatprep.subr.mxu0 0.0
    %1883 = vmatpush1.msra.mxu0 0.0
    %1884 = vmatprep.subr.mxu0 0.0
    %1885 = vmatpush1.msra.mxu0 0.0
    %1886 = vmatprep.subr.mxu0 0.0
    %1887 = vmatpush1.msra.mxu0 0.0
    %1888 = vmatprep.subr.mxu0 0.0
    %1889 = vmatpush1.msra.mxu0 0.0
    %1890 = vmatprep.subr.mxu0 0.0
    %1891 = vmatpush1.msra.mxu0 0.0
    %1892 = vmatprep.mubr.f32.mxu0 0.0
    %1893 = vmatmul.mubr.f32.gmra.mrb[0].mxu0 %v1826
    %v1894 = vpop.f32.mrb[0].mxu0
    %v1895 = vadd.f32 0.0, %v1894
    %v1896 = vpop.f32.mrb[0].mxu0
    %1897 = vdwg.mxu0
    %v1899 = vsel %vm298, %v1895, 0
    %1901 = vmatprep.subr.mxu0 0.0
    %1902 = vmatpush1.msra.mxu0 %v289
    %1903 = vmatprep.subr.mxu0 0.0
    %1904 = vmatpush1.msra.mxu0 0.0
    %1905 = vmatprep.subr.mxu0 0.0
    %1906 = vmatpush1.msra.mxu0 0.0
    %1907 = vmatprep.subr.mxu0 0.0
    %1908 = vmatpush1.msra.mxu0 0.0
    %1909 = vmatprep.subr.mxu0 0.0
    %1910 = vmatpush1.msra.mxu0 0.0
    %1911 = vmatprep.subr.mxu0 0.0
    %1912 = vmatpush1.msra.mxu0 0.0
    %1913 = vmatprep.subr.mxu0 0.0
    %1914 = vmatpush1.msra.mxu0 0.0
    %1915 = vmatprep.subr.mxu0 0.0
    %1916 = vmatpush1.msra.mxu0 0.0
    %1917 = vmatprep.subr.mxu0 0.0
    %1918 = vmatpush1.msra.mxu0 0.0
    %1919 = vmatprep.subr.mxu0 0.0
    %1920 = vmatpush1.msra.mxu0 0.0
    %1921 = vmatprep.subr.mxu0 0.0
    %1922 = vmatpush1.msra.mxu0 0.0
    %1923 = vmatprep.subr.mxu0 0.0
    %1924 = vmatpush1.msra.mxu0 0.0
    %1925 = vmatprep.subr.mxu0 0.0
    %1926 = vmatpush1.msra.mxu0 0.0
    %1927 = vmatprep.subr.mxu0 0.0
    %1928 = vmatpush1.msra.mxu0 0.0
    %1929 = vmatprep.subr.mxu0 0.0
    %1930 = vmatpush1.msra.mxu0 0.0
    %1931 = vmatprep.subr.mxu0 0.0
    %1932 = vmatpush1.msra.mxu0 0.0
    %1933 = vmatprep.subr.mxu0 0.0
    %1934 = vmatpush1.msra.mxu0 0.0
    %1935 = vmatprep.subr.mxu0 0.0
    %1936 = vmatpush1.msra.mxu0 0.0
    %1937 = vmatprep.subr.mxu0 0.0
    %1938 = vmatpush1.msra.mxu0 0.0
    %1939 = vmatprep.subr.mxu0 0.0
    %1940 = vmatpush1.msra.mxu0 0.0
    %1941 = vmatprep.subr.mxu0 0.0
    %1942 = vmatpush1.msra.mxu0 0.0
    %1943 = vmatprep.subr.mxu0 0.0
    %1944 = vmatpush1.msra.mxu0 0.0
    %1945 = vmatprep.subr.mxu0 0.0
    %1946 = vmatpush1.msra.mxu0 0.0
    %1947 = vmatprep.subr.mxu0 0.0
    %1948 = vmatpush1.msra.mxu0 0.0
    %1949 = vmatprep.subr.mxu0 0.0
    %1950 = vmatpush1.msra.mxu0 0.0
    %1951 = vmatprep.subr.mxu0 0.0
    %1952 = vmatpush1.msra.mxu0 0.0
    %1953 = vmatprep.subr.mxu0 0.0
    %1954 = vmatpush1.msra.mxu0 0.0
    %1955 = vmatprep.subr.mxu0 0.0
    %1956 = vmatpush1.msra.mxu0 0.0
    %1957 = vmatprep.subr.mxu0 0.0
    %1958 = vmatpush1.msra.mxu0 0.0
    %1959 = vmatprep.subr.mxu0 0.0
    %1960 = vmatpush1.msra.mxu0 0.0
    %1961 = vmatprep.subr.mxu0 0.0
    %1962 = vmatpush1.msra.mxu0 0.0
    %1963 = vmatprep.subr.mxu0 0.0
    %1964 = vmatpush1.msra.mxu0 0.0
    %1965 = vmatprep.mubr.f32.mxu0 0.0
    %1966 = vmatmul.mubr.f32.gmra.mrb[0].mxu0 %v1899
    %v1967 = vpop.f32.mrb[0].mxu0
    %v1968 = vadd.f32 0.0, %v1967
    %v1969 = vpop.f32.mrb[0].mxu0
    %1970 = vdwg.mxu0
    %v1971 = vadd.f32 %v1730, %v1968
    %1972 = vrot.lane.b32.xlu0 %v190, 104
    %v1973 = vpop.permute.xlu0 %1972
    %1974 = vrot.lane.b32.xlu0 %v284, 104
    %v1975 = vpop.permute.xlu0 %1974
    %v1976 = vsel %vm298, %v1973, 0
    %v1978 = vsel %vm298, %v1975, 0
    %1980 = vmatprep.subr.mxu0 0.0
    %1981 = vmatpush1.xpose.msra.mxu0 %v1978
    %1982 = vmatprep.subr.mxu0 0.0
    %1983 = vmatpush1.xpose.msra.mxu0 0.0
    %1984 = vmatprep.subr.mxu0 0.0
    %1985 = vmatpush1.xpose.msra.mxu0 0.0
    %1986 = vmatprep.subr.mxu0 0.0
    %1987 = vmatpush1.xpose.msra.mxu0 0.0
    %1988 = vmatprep.subr.mxu0 0.0
    %1989 = vmatpush1.xpose.msra.mxu0 0.0
    %1990 = vmatprep.subr.mxu0 0.0
    %1991 = vmatpush1.xpose.msra.mxu0 0.0
    %1992 = vmatprep.subr.mxu0 0.0
    %1993 = vmatpush1.xpose.msra.mxu0 0.0
    %1994 = vmatprep.subr.mxu0 0.0
    %1995 = vmatpush1.xpose.msra.mxu0 0.0
    %1996 = vmatprep.subr.mxu0 0.0
    %1997 = vmatpush1.xpose.msra.mxu0 0.0
    %1998 = vmatprep.subr.mxu0 0.0
    %1999 = vmatpush1.xpose.msra.mxu0 0.0
    %2000 = vmatprep.subr.mxu0 0.0
    %2001 = vmatpush1.xpose.msra.mxu0 0.0
    %2002 = vmatprep.subr.mxu0 0.0
    %2003 = vmatpush1.xpose.msra.mxu0 0.0
    %2004 = vmatprep.subr.mxu0 0.0
    %2005 = vmatpush1.xpose.msra.mxu0 0.0
    %2006 = vmatprep.subr.mxu0 0.0
    %2007 = vmatpush1.xpose.msra.mxu0 0.0
    %2008 = vmatprep.subr.mxu0 0.0
    %2009 = vmatpush1.xpose.msra.mxu0 0.0
    %2010 = vmatprep.subr.mxu0 0.0
    %2011 = vmatpush1.xpose.msra.mxu0 0.0
    %2012 = vmatprep.subr.mxu0 0.0
    %2013 = vmatpush1.xpose.msra.mxu0 0.0
    %2014 = vmatprep.subr.mxu0 0.0
    %2015 = vmatpush1.xpose.msra.mxu0 0.0
    %2016 = vmatprep.subr.mxu0 0.0
    %2017 = vmatpush1.xpose.msra.mxu0 0.0
    %2018 = vmatprep.subr.mxu0 0.0
    %2019 = vmatpush1.xpose.msra.mxu0 0.0
    %2020 = vmatprep.subr.mxu0 0.0
    %2021 = vmatpush1.xpose.msra.mxu0 0.0
    %2022 = vmatprep.subr.mxu0 0.0
    %2023 = vmatpush1.xpose.msra.mxu0 0.0
    %2024 = vmatprep.subr.mxu0 0.0
    %2025 = vmatpush1.xpose.msra.mxu0 0.0
    %2026 = vmatprep.subr.mxu0 0.0
    %2027 = vmatpush1.xpose.msra.mxu0 0.0
    %2028 = vmatprep.subr.mxu0 0.0
    %2029 = vmatpush1.xpose.msra.mxu0 0.0
    %2030 = vmatprep.subr.mxu0 0.0
    %2031 = vmatpush1.xpose.msra.mxu0 0.0
    %2032 = vmatprep.subr.mxu0 0.0
    %2033 = vmatpush1.xpose.msra.mxu0 0.0
    %2034 = vmatprep.subr.mxu0 0.0
    %2035 = vmatpush1.xpose.msra.mxu0 0.0
    %2036 = vmatprep.subr.mxu0 0.0
    %2037 = vmatpush1.xpose.msra.mxu0 0.0
    %2038 = vmatprep.subr.mxu0 0.0
    %2039 = vmatpush1.xpose.msra.mxu0 0.0
    %2040 = vmatprep.subr.mxu0 0.0
    %2041 = vmatpush1.xpose.msra.mxu0 0.0
    %2042 = vmatprep.subr.mxu0 0.0
    %2043 = vmatpush1.xpose.msra.mxu0 0.0
    %2044 = vmatprep.mubr.f32.mxu0 0.0
    %2045 = vmatmul.mubr.f32.gmra.mrb[0].mxu0 %v1976
    %v2046 = vpop.f32.mrb[0].mxu0
    %v2047 = vadd.f32 %v297, %v2046
    %v2048 = vpop.f32.mrb[0].mxu0
    %2049 = vdwg.mxu0
    %v2050 = vsel %vm298, %v2047, -inf
    %2051 = vmax.xlane.f32.xlu0 %v2050
    %v2052 = vpop.xlane.xlu0 %2051
    %v2053 = vsub.f32 %v2047, %v2052
    %v2054 = vmul.f32 %v2053, 1.442695
    %v2055 = vpow.pop %v2054
    %v2056 = vsel %vm298, %v2055, 0.0
    %2057 = vadd.xlane.f32.xlu0 %v2056
    %v2058 = vpop.xlane.xlu0 %2057
    %v2059 = vrcp.pop %v2058
    %v2060 = vmul.f32 %v2055, %v2059
    %2061 = vrot.lane.b32.xlu0 %v284, 72
    %v2062 = vpop.permute.xlu0 %2061
    %v2065 = vsel %vm298, %v2060, 0
    %2067 = vmatprep.subr.mxu0 0.0
    %2068 = vmatpush1.msra.mxu0 %v2062
    %2069 = vmatprep.subr.mxu0 0.0
    %2070 = vmatpush1.msra.mxu0 0.0
    %2071 = vmatprep.subr.mxu0 0.0
    %2072 = vmatpush1.msra.mxu0 0.0
    %2073 = vmatprep.subr.mxu0 0.0
    %2074 = vmatpush1.msra.mxu0 0.0
    %2075 = vmatprep.subr.mxu0 0.0
    %2076 = vmatpush1.msra.mxu0 0.0
    %2077 = vmatprep.subr.mxu0 0.0
    %2078 = vmatpush1.msra.mxu0 0.0
    %2079 = vmatprep.subr.mxu0 0.0
    %2080 = vmatpush1.msra.mxu0 0.0
    %2081 = vmatprep.subr.mxu0 0.0
    %2082 = vmatpush1.msra.mxu0 0.0
    %2083 = vmatprep.subr.mxu0 0.0
    %2084 = vmatpush1.msra.mxu0 0.0
    %2085 = vmatprep.subr.mxu0 0.0
    %2086 = vmatpush1.msra.mxu0 0.0
    %2087 = vmatprep.subr.mxu0 0.0
    %2088 = vmatpush1.msra.mxu0 0.0
    %2089 = vmatprep.subr.mxu0 0.0
    %2090 = vmatpush1.msra.mxu0 0.0
    %2091 = vmatprep.subr.mxu0 0.0
    %2092 = vmatpush1.msra.mxu0 0.0
    %2093 = vmatprep.subr.mxu0 0.0
    %2094 = vmatpush1.msra.mxu0 0.0
    %2095 = vmatprep.subr.mxu0 0.0
    %2096 = vmatpush1.msra.mxu0 0.0
    %2097 = vmatprep.subr.mxu0 0.0
    %2098 = vmatpush1.msra.mxu0 0.0
    %2099 = vmatprep.subr.mxu0 0.0
    %2100 = vmatpush1.msra.mxu0 0.0
    %2101 = vmatprep.subr.mxu0 0.0
    %2102 = vmatpush1.msra.mxu0 0.0
    %2103 = vmatprep.subr.mxu0 0.0
    %2104 = vmatpush1.msra.mxu0 0.0
    %2105 = vmatprep.subr.mxu0 0.0
    %2106 = vmatpush1.msra.mxu0 0.0
    %2107 = vmatprep.subr.mxu0 0.0
    %2108 = vmatpush1.msra.mxu0 0.0
    %2109 = vmatprep.subr.mxu0 0.0
    %2110 = vmatpush1.msra.mxu0 0.0
    %2111 = vmatprep.subr.mxu0 0.0
    %2112 = vmatpush1.msra.mxu0 0.0
    %2113 = vmatprep.subr.mxu0 0.0
    %2114 = vmatpush1.msra.mxu0 0.0
    %2115 = vmatprep.subr.mxu0 0.0
    %2116 = vmatpush1.msra.mxu0 0.0
    %2117 = vmatprep.subr.mxu0 0.0
    %2118 = vmatpush1.msra.mxu0 0.0
    %2119 = vmatprep.subr.mxu0 0.0
    %2120 = vmatpush1.msra.mxu0 0.0
    %2121 = vmatprep.subr.mxu0 0.0
    %2122 = vmatpush1.msra.mxu0 0.0
    %2123 = vmatprep.subr.mxu0 0.0
    %2124 = vmatpush1.msra.mxu0 0.0
    %2125 = vmatprep.subr.mxu0 0.0
    %2126 = vmatpush1.msra.mxu0 0.0
    %2127 = vmatprep.subr.mxu0 0.0
    %2128 = vmatpush1.msra.mxu0 0.0
    %2129 = vmatprep.subr.mxu0 0.0
    %2130 = vmatpush1.msra.mxu0 0.0
    %2131 = vmatprep.mubr.f32.mxu0 0.0
    %2132 = vmatmul.mubr.f32.gmra.mrb[0].mxu0 %v2065
    %v2133 = vpop.f32.mrb[0].mxu0
    %v2134 = vadd.f32 0.0, %v2133
    %v2135 = vpop.f32.mrb[0].mxu0
    %2136 = vdwg.mxu0
    %v2138 = vsel %vm298, %v2134, 0
    %2140 = vmatprep.subr.mxu0 0.0
    %2141 = vmatpush1.msra.mxu0 %v290
    %2142 = vmatprep.subr.mxu0 0.0
    %2143 = vmatpush1.msra.mxu0 0.0
    %2144 = vmatprep.subr.mxu0 0.0
    %2145 = vmatpush1.msra.mxu0 0.0
    %2146 = vmatprep.subr.mxu0 0.0
    %2147 = vmatpush1.msra.mxu0 0.0
    %2148 = vmatprep.subr.mxu0 0.0
    %2149 = vmatpush1.msra.mxu0 0.0
    %2150 = vmatprep.subr.mxu0 0.0
    %2151 = vmatpush1.msra.mxu0 0.0
    %2152 = vmatprep.subr.mxu0 0.0
    %2153 = vmatpush1.msra.mxu0 0.0
    %2154 = vmatprep.subr.mxu0 0.0
    %2155 = vmatpush1.msra.mxu0 0.0
    %2156 = vmatprep.subr.mxu0 0.0
    %2157 = vmatpush1.msra.mxu0 0.0
    %2158 = vmatprep.subr.mxu0 0.0
    %2159 = vmatpush1.msra.mxu0 0.0
    %2160 = vmatprep.subr.mxu0 0.0
    %2161 = vmatpush1.msra.mxu0 0.0
    %2162 = vmatprep.subr.mxu0 0.0
    %2163 = vmatpush1.msra.mxu0 0.0
    %2164 = vmatprep.subr.mxu0 0.0
    %2165 = vmatpush1.msra.mxu0 0.0
    %2166 = vmatprep.subr.mxu0 0.0
    %2167 = vmatpush1.msra.mxu0 0.0
    %2168 = vmatprep.subr.mxu0 0.0
    %2169 = vmatpush1.msra.mxu0 0.0
    %2170 = vmatprep.subr.mxu0 0.0
    %2171 = vmatpush1.msra.mxu0 0.0
    %2172 = vmatprep.subr.mxu0 0.0
    %2173 = vmatpush1.msra.mxu0 0.0
    %2174 = vmatprep.subr.mxu0 0.0
    %2175 = vmatpush1.msra.mxu0 0.0
    %2176 = vmatprep.subr.mxu0 0.0
    %2177 = vmatpush1.msra.mxu0 0.0
    %2178 = vmatprep.subr.mxu0 0.0
    %2179 = vmatpush1.msra.mxu0 0.0
    %2180 = vmatprep.subr.mxu0 0.0
    %2181 = vmatpush1.msra.mxu0 0.0
    %2182 = vmatprep.subr.mxu0 0.0
    %2183 = vmatpush1.msra.mxu0 0.0
    %2184 = vmatprep.subr.mxu0 0.0
    %2185 = vmatpush1.msra.mxu0 0.0
    %2186 = vmatprep.subr.mxu0 0.0
    %2187 = vmatpush1.msra.mxu0 0.0
    %2188 = vmatprep.subr.mxu0 0.0
    %2189 = vmatpush1.msra.mxu0 0.0
    %2190 = vmatprep.subr.mxu0 0.0
    %2191 = vmatpush1.msra.mxu0 0.0
    %2192 = vmatprep.subr.mxu0 0.0
    %2193 = vmatpush1.msra.mxu0 0.0
    %2194 = vmatprep.subr.mxu0 0.0
    %2195 = vmatpush1.msra.mxu0 0.0
    %2196 = vmatprep.subr.mxu0 0.0
    %2197 = vmatpush1.msra.mxu0 0.0
    %2198 = vmatprep.subr.mxu0 0.0
    %2199 = vmatpush1.msra.mxu0 0.0
    %2200 = vmatprep.subr.mxu0 0.0
    %2201 = vmatpush1.msra.mxu0 0.0
    %2202 = vmatprep.subr.mxu0 0.0
    %2203 = vmatpush1.msra.mxu0 0.0
    %2204 = vmatprep.mubr.f32.mxu0 0.0
    %2205 = vmatmul.mubr.f32.gmra.mrb[0].mxu0 %v2138
    %v2206 = vpop.f32.mrb[0].mxu0
    %v2207 = vadd.f32 0.0, %v2206
    %v2208 = vpop.f32.mrb[0].mxu0
    %2209 = vdwg.mxu0
    %v2210 = vadd.f32 %v1971, %v2207
    %v2211 = vadd.f32 %v2210, %v1255
    %2212 = vst.msk [vmem:[#allocation11 + $0x8] sm:$0xff] %vm111, %v2211
    // Predicated region
    $region54: #{tpu_custom_call.1} parent=1 // pred_check
      _
    $region55: #{tpu_custom_call.1} parent=1 // pred_check_branch
      %2214 = sbr.rel (0) target = $region57
    $region56: #{tpu_custom_call.1} parent=1 // pred_region
      %s2216 = ssub.s32 256, 256
      %2217 = vsyncadd [#allocation4], %s2216
      %s2218 = sshll.u32 [#allocation11], 4
      %s2219 = int_to_ptr.vmem [resolvable:$true] %s2218
      %2224 = dma.vmem_to_hbm [thread:$0]  %s2219, 256, %s8, [#allocation4], 128, 128, 8
    $region57: #{tpu_custom_call.1} parent=1 // pred_fallthru
      _
    // Predicated region
    $region58: #{tpu_custom_call.1} parent=1 // pred_check
      _
    $region59: #{tpu_custom_call.1} parent=1 // pred_check_branch
      %2226 = sbr.rel (0) target = $region61
    $region60: #{tpu_custom_call.1} parent=1 // pred_region
      %2227 = dma.done [#allocation4], 256
    $region61: #{tpu_custom_call.1} parent=1 // pred_fallthru
      _
    %2228 = vsyncpa [#allocation3], 1
    %2229 = vsyncpa [#allocation6], 1
    %2230 = vsyncpa [#allocation9], 1
    %2231 = vsyncpa [#allocation4], 1

</llo_original>
